<compile_context>
chip_gen: v7x
topology: tpu7x:2x2x1
jax: 0.10.0
libtpu: 0.0.40
codegen_flags: <defaults>
</compile_context>

<pallas_src>
import jax
import jax.numpy as jnp
from jax.experimental import pallas as pl
from jax.experimental.pallas import tpu as pltpu

# ---- model hyper-parameters (small, consistent with SimpleGNN defaults
#      scaled down: hidden=32 instead of 64, 6 GCN layers) --------------------
NUM_GRAPHS = 4        # graphs in the batch
NODES_PER_GRAPH = 16
N_NODES = NUM_GRAPHS * NODES_PER_GRAPH   # 64 total nodes
NUM_FEATURES = 16     # dataset.num_node_features
HIDDEN = 32           # hidden
LAYERS = 6            # layers
NUM_CLASSES = 8       # dataset.num_classes


def simple_gnn_kernel(adj_ref, x_ref, pool_ref, gcnw_ref, bias_ref, headw_ref,
                      out_ref):
    """Full SimpleGNN forward on one batch of graphs (single grid point).

    gcnw_ref : [LAYERS, HIDDEN, HIDDEN]   (layer 0 weight zero-padded rows F..H)
    bias_ref : [LAYERS + 3, HIDDEN]       rows 0..L-1 gcn, L jk, L+1 lin1, L+2 lin2
    headw_ref: [LAYERS*HIDDEN + 2*HIDDEN, HIDDEN]  (jkw | w1 | w2 zero-padded cols)
    """
    bf16 = jnp.bfloat16
    f32 = jnp.float32

    adj = adj_ref[...].astype(bf16)                       # [N, N], reused every layer

    # ---- GCN layer 0: relu( (Â @ X) @ W0 + b0 )  (aggregate-first: F < H) ----
    ax = jnp.dot(adj, x_ref[...].astype(bf16), preferred_element_type=f32)   # [N, F]
    w0 = gcnw_ref[0, 0:NUM_FEATURES, :].astype(bf16)                          # [F, H]
    h = jnp.dot(ax.astype(bf16), w0, preferred_element_type=f32) + bias_ref[0:1, :]
    h = jnp.maximum(h, 0.0)                                                   # [N, H]

    # ---- JumpingKnowledge(cat) @ jk_lin as a running sum of partial matmuls ----
    xj = jnp.dot(h.astype(bf16), headw_ref[0:HIDDEN, :].astype(bf16),
                 preferred_element_type=f32)                                  # [N, H]

    # ---- GCN layers 1..L-1 (static Python unroll, activations stay in vregs) ---
    for l in range(1, LAYERS):
        w = gcnw_ref[l].astype(bf16)                                          # [H, H]
        hw = jnp.dot(h.astype(bf16), w, preferred_element_type=f32)
        h = jnp.dot(adj, hw.astype(bf16), preferred_element_type=f32) \
            + bias_ref[l:l + 1, :]
        h = jnp.maximum(h, 0.0)
        xj = xj + jnp.dot(h.astype(bf16),
                          headw_ref[l * HIDDEN:(l + 1) * HIDDEN, :].astype(bf16),
                          preferred_element_type=f32)

    # ---- jk_lin bias + relu -----------------------------------------------------
    xj = jnp.maximum(xj + bias_ref[LAYERS:LAYERS + 1, :], 0.0)                # [N, H]

    # ---- global_add_pool (dense pooling matmul) ----------------------------------
    pooled = jnp.dot(pool_ref[...].astype(bf16), xj.astype(bf16),
                     preferred_element_type=f32)                              # [G, H]

    # ---- lin_1 -> relu ------------------------------------------------------------
    w1 = headw_ref[LAYERS * HIDDEN:(LAYERS + 1) * HIDDEN, :].astype(bf16)
    p1 = jnp.dot(pooled.astype(bf16), w1, preferred_element_type=f32) \
        + bias_ref[LAYERS + 1:LAYERS + 2, :]
    p1 = jnp.maximum(p1, 0.0)                                                 # [G, H]

    # ---- lin_2 -> softmax(dim=-1) ---------------------------------------------------
    w2 = headw_ref[(LAYERS + 1) * HIDDEN:(LAYERS + 2) * HIDDEN,
                   0:NUM_CLASSES].astype(bf16)                                # [H, C]
    logits = jnp.dot(p1.astype(bf16), w2, preferred_element_type=f32) \
        + bias_ref[LAYERS + 2:LAYERS + 3, 0:NUM_CLASSES]                      # [G, C]
    m = jnp.max(logits, axis=-1, keepdims=True)
    e = jnp.exp(logits - m)
    out_ref[...] = e / jnp.sum(e, axis=-1, keepdims=True)


# --------------------------- parameter packing (glue) --------------------------
def pack_params(params):
    """Pack the 10 raw parameter tensors into 3 slabs (fewer, larger DMAs)."""
    (w0, b0, wrest, brest, jkw, jkb, w1, b1, w2, b2) = params

    # GCN weights: [LAYERS, H, H]; layer-0 weight zero-padded rows F..H.
    w0_pad = jnp.zeros((HIDDEN, HIDDEN), jnp.float32).at[:NUM_FEATURES, :].set(w0)
    gcn_w = jnp.concatenate([w0_pad[None], wrest], axis=0)

    # Bias slab: rows 0..L-1 gcn biases, L jk bias, L+1 lin1 bias, L+2 lin2 bias.
    b2_pad = jnp.zeros((1, HIDDEN), jnp.float32).at[:, :NUM_CLASSES].set(b2)
    bias = jnp.concatenate(
        [b0, brest.reshape(LAYERS - 1, HIDDEN), jkb, b1, b2_pad], axis=0)

    # Head weights: [L*H + 2*H, H] = jkw | w1 | w2 (cols padded to H).
    w2_pad = jnp.zeros((HIDDEN, HIDDEN), jnp.float32).at[:, :NUM_CLASSES].set(w2)
    head_w = jnp.concatenate([jkw, w1, w2_pad], axis=0)
    return gcn_w, bias, head_w


def simple_gnn_forward(adj, x, pool, params):
    """Wrapper: one pallas_call, everything resident in VMEM (tiny shapes)."""
    gcn_w, bias, head_w = pack_params(params)
    vmem = pl.BlockSpec(memory_space=pltpu.MemorySpace.VMEM)
    return pl.pallas_call(
        simple_gnn_kernel,
        out_shape=jax.ShapeDtypeStruct((NUM_GRAPHS, NUM_CLASSES), jnp.float32),
        in_specs=[vmem] * 6,
        out_specs=vmem,
    )(adj, x, pool, gcn_w, bias, head_w)


# ---------------------------- plain-JAX references -----------------------------
def simple_gnn_reference_f32(adj, x, pool, params):
    """Full-f32, highest-precision reference (module semantics)."""
    (w0, b0, wrest, brest, jkw, jkb, w1, b1, w2, b2) = params
    hp = jax.lax.Precision.HIGHEST
    h = x
    xs = []
    h = jnp.maximum(jnp.dot(adj, jnp.dot(h, w0, precision=hp), precision=hp) + b0, 0.0)
    xs.append(h)
    for l in range(1, LAYERS):
        h = jnp.maximum(jnp.dot(adj, jnp.dot(h, wrest[l - 1], precision=hp),
                                precision=hp) + brest[l - 1], 0.0)
        xs.append(h)
    xcat = jnp.concatenate(xs, axis=-1)
    xj = jnp.maximum(jnp.dot(xcat, jkw, precision=hp) + jkb, 0.0)
    pooled = jnp.dot(pool, xj, precision=hp)
    p1 = jnp.maximum(jnp.dot(pooled, w1, precision=hp) + b1, 0.0)
    logits = jnp.dot(p1, w2, precision=hp) + b2
    return jax.nn.softmax(logits, axis=-1)


def simple_gnn_reference_bf16(adj, x, pool, params):
    """Reference replicating the kernel's bf16-operand / f32-accumulate math."""
    gcn_w, bias, head_w = pack_params(params)
    bf16, f32 = jnp.bfloat16, jnp.float32

    def mm(a, b):
        return jnp.dot(a.astype(bf16), b.astype(bf16), preferred_element_type=f32)

    ax = mm(adj, x)
    h = jnp.maximum(mm(ax, gcn_w[0, :NUM_FEATURES, :]) + bias[0:1, :], 0.0)
    xj = mm(h, head_w[0:HIDDEN, :])
    for l in range(1, LAYERS):
        h = jnp.maximum(mm(adj, mm(h, gcn_w[l])) + bias[l:l + 1, :], 0.0)
        xj = xj + mm(h, head_w[l * HIDDEN:(l + 1) * HIDDEN, :])
    xj = jnp.maximum(xj + bias[LAYERS:LAYERS + 1, :], 0.0)
    pooled = mm(pool, xj)
    p1 = jnp.maximum(mm(pooled, head_w[LAYERS * HIDDEN:(LAYERS + 1) * HIDDEN, :])
                     + bias[LAYERS + 1:LAYERS + 2, :], 0.0)
    logits = mm(p1, head_w[(LAYERS + 1) * HIDDEN:(LAYERS + 2) * HIDDEN, :NUM_CLASSES]) \
        + bias[LAYERS + 2:LAYERS + 3, :NUM_CLASSES]
    return jax.nn.softmax(logits, axis=-1)


# ------------------------------ parameter init ---------------------------------
def init_params(key):
    ks = jax.random.split(key, 12)

    def lin(k, fan_in, fan_out):
        scale = 1.0 / jnp.sqrt(jnp.float32(fan_in))
        return jax.random.uniform(k, (fan_in, fan_out), jnp.float32, -scale, scale)

    w0 = lin(ks[0], NUM_FEATURES, HIDDEN)
    b0 = jnp.zeros((1, HIDDEN), jnp.float32)
    wrest = jnp.stack([lin(ks[1 + i], HIDDEN, HIDDEN) for i in range(LAYERS - 1)])
    brest = jnp.zeros((LAYERS - 1, 1, HIDDEN), jnp.float32)
    jkw = lin(ks[6], HIDDEN * LAYERS, HIDDEN)
    jkb = 0.01 * jax.random.normal(ks[7], (1, HIDDEN), jnp.float32)
    w1 = lin(ks[8], HIDDEN, HIDDEN)
    b1 = 0.01 * jax.random.normal(ks[9], (1, HIDDEN), jnp.float32)
    w2 = lin(ks[10], HIDDEN, NUM_CLASSES)
    b2 = 0.01 * jax.random.normal(ks[11], (1, NUM_CLASSES), jnp.float32)
    return (w0, b0, wrest, brest, jkw, jkb, w1, b1, w2, b2)


# ----------------------------- synthetic graph data ----------------------------
def build_graph_batch(key):
    """Deterministic batch of NUM_GRAPHS random graphs (block-diagonal adjacency)."""
    kx, ke = jax.random.split(key)
    x = jax.random.normal(kx, (N_NODES, NUM_FEATURES), jnp.float32)
    batch = jnp.repeat(jnp.arange(NUM_GRAPHS, dtype=jnp.int32), NODES_PER_GRAPH)

    # random undirected edges, restricted to within-graph pairs
    rand = jax.random.bernoulli(ke, 0.3, (N_NODES, N_NODES)).astype(jnp.float32)
    rand = jnp.maximum(rand, rand.T)                       # symmetric
    same_graph = (batch[:, None] == batch[None, :]).astype(jnp.float32)
    a = rand * same_graph * (1.0 - jnp.eye(N_NODES, dtype=jnp.float32))

    # GCN normalization with self-loops: Â = D^{-1/2}(A + I)D^{-1/2}
    a_hat = a + jnp.eye(N_NODES, dtype=jnp.float32)
    deg = jnp.sum(a_hat, axis=1)
    dinv = 1.0 / jnp.sqrt(deg)
    adj_norm = a_hat * dinv[:, None] * dinv[None, :]

    # global_add_pool as dense matrix: pool[g, n] = 1 if node n belongs to graph g
    pool = (batch[None, :] == jnp.arange(NUM_GRAPHS, dtype=jnp.int32)[:, None]
            ).astype(jnp.float32)
    return adj_norm, x, pool


if __name__ == "__main__":
    key = jax.random.PRNGKey(0)
    k_data, k_params = jax.random.split(key)

    adj, x, pool = build_graph_batch(k_data)
    params = init_params(k_params)

    out = simple_gnn_forward(adj, x, pool, params)
    out = jax.block_until_ready(out)

    # basic sanity
    assert out.shape == (NUM_GRAPHS, NUM_CLASSES)
    assert bool(jnp.all(jnp.isfinite(out)))
    assert bool(jnp.allclose(jnp.sum(out, axis=-1), 1.0, atol=1e-4))

    # tight check vs a JAX reference running the exact same bf16-MXU / f32-acc math
    ref_bf16 = simple_gnn_reference_bf16(adj, x, pool, params)
    assert bool(jnp.allclose(out, ref_bf16, atol=2e-3, rtol=2e-3))

    # loose check vs the full-f32 module semantics (bf16 operand rounding only)
    ref_f32 = simple_gnn_reference_f32(adj, x, pool, params)
    assert bool(jnp.allclose(out, ref_f32, atol=5e-2, rtol=5e-2))

    print("KERNEL_OK")
</pallas_src>

<mosaic_0001>
module attributes {stable_mosaic.version = 11 : i64} {
  func.func @simple_gnn_kernel(%arg0: memref<64x64xf32, #tpu.memory_space<vmem>>, %arg1: memref<64x16xf32, #tpu.memory_space<vmem>>, %arg2: memref<4x64xf32, #tpu.memory_space<vmem>>, %arg3: memref<6x32x32xf32, #tpu.memory_space<vmem>>, %arg4: memref<9x32xf32, #tpu.memory_space<vmem>>, %arg5: memref<256x32xf32, #tpu.memory_space<vmem>>, %arg6: memref<4x8xf32, #tpu.memory_space<vmem>>) attributes {dimension_semantics = [], scalar_prefetch = 0 : i64, scratch_operands = 0 : i64, tpu.core_type = #tpu.core_type<tc>} {
    %c0 = arith.constant 0 : index
    %c0_0 = arith.constant 0 : index
    %0 = vector.load %arg0[%c0, %c0_0] : memref<64x64xf32, #tpu.memory_space<vmem>>, vector<64x64xf32>
    %1 = arith.truncf %0 : vector<64x64xf32> to vector<64x64xbf16>
    %c0_1 = arith.constant 0 : index
    %c0_2 = arith.constant 0 : index
    %2 = vector.load %arg1[%c0_1, %c0_2] : memref<64x16xf32, #tpu.memory_space<vmem>>, vector<64x16xf32>
    %3 = arith.truncf %2 : vector<64x16xf32> to vector<64x16xbf16>
    %cst = arith.constant dense<0.000000e+00> : vector<64x16xf32>
    %4 = tpu.matmul %1, %3, %cst {dimension_numbers = #tpu.dot_dimension_numbers<[1], [0], [0], [1], [0, 0, 1, 1], [], []>} : vector<64x64xbf16>, vector<64x16xbf16>, vector<64x16xf32> -> vector<64x16xf32>
    %c0_3 = arith.constant 0 : index
    %c0_4 = arith.constant 0 : index
    %c0_5 = arith.constant 0 : index
    %5 = vector.load %arg3[%c0_3, %c0_4, %c0_5] : memref<6x32x32xf32, #tpu.memory_space<vmem>>, vector<1x16x32xf32>
    %6 = vector.shape_cast %5 : vector<1x16x32xf32> to vector<16x32xf32>
    %7 = arith.truncf %6 : vector<16x32xf32> to vector<16x32xbf16>
    %8 = arith.truncf %4 : vector<64x16xf32> to vector<64x16xbf16>
    %cst_6 = arith.constant dense<0.000000e+00> : vector<64x32xf32>
    %9 = tpu.matmul %8, %7, %cst_6 {dimension_numbers = #tpu.dot_dimension_numbers<[1], [0], [0], [1], [0, 0, 1, 1], [], []>} : vector<64x16xbf16>, vector<16x32xbf16>, vector<64x32xf32> -> vector<64x32xf32>
    %c0_7 = arith.constant 0 : index
    %c0_8 = arith.constant 0 : index
    %10 = vector.load %arg4[%c0_7, %c0_8] : memref<9x32xf32, #tpu.memory_space<vmem>>, vector<1x32xf32>
    %11 = vector.broadcast %10 : vector<1x32xf32> to vector<64x32xf32>
    %12 = arith.addf %9, %11 : vector<64x32xf32>
    %cst_9 = arith.constant 0.000000e+00 : f32
    %13 = vector.broadcast %cst_9 : f32 to vector<64x32xf32>
    %14 = arith.maximumf %12, %13 : vector<64x32xf32>
    %15 = arith.truncf %14 : vector<64x32xf32> to vector<64x32xbf16>
    %c0_10 = arith.constant 0 : index
    %c0_11 = arith.constant 0 : index
    %16 = vector.load %arg5[%c0_10, %c0_11] : memref<256x32xf32, #tpu.memory_space<vmem>>, vector<32x32xf32>
    %17 = arith.truncf %16 : vector<32x32xf32> to vector<32x32xbf16>
    %cst_12 = arith.constant dense<0.000000e+00> : vector<64x32xf32>
    %18 = tpu.matmul %15, %17, %cst_12 {dimension_numbers = #tpu.dot_dimension_numbers<[1], [0], [0], [1], [0, 0, 1, 1], [], []>} : vector<64x32xbf16>, vector<32x32xbf16>, vector<64x32xf32> -> vector<64x32xf32>
    %c1 = arith.constant 1 : index
    %c0_13 = arith.constant 0 : index
    %c0_14 = arith.constant 0 : index
    %19 = vector.load %arg3[%c1, %c0_13, %c0_14] : memref<6x32x32xf32, #tpu.memory_space<vmem>>, vector<1x32x32xf32>
    %20 = vector.shape_cast %19 : vector<1x32x32xf32> to vector<32x32xf32>
    %21 = arith.truncf %20 : vector<32x32xf32> to vector<32x32xbf16>
    %22 = arith.truncf %14 : vector<64x32xf32> to vector<64x32xbf16>
    %cst_15 = arith.constant dense<0.000000e+00> : vector<64x32xf32>
    %23 = tpu.matmul %22, %21, %cst_15 {dimension_numbers = #tpu.dot_dimension_numbers<[1], [0], [0], [1], [0, 0, 1, 1], [], []>} : vector<64x32xbf16>, vector<32x32xbf16>, vector<64x32xf32> -> vector<64x32xf32>
    %24 = arith.truncf %23 : vector<64x32xf32> to vector<64x32xbf16>
    %cst_16 = arith.constant dense<0.000000e+00> : vector<64x32xf32>
    %25 = tpu.matmul %1, %24, %cst_16 {dimension_numbers = #tpu.dot_dimension_numbers<[1], [0], [0], [1], [0, 0, 1, 1], [], []>} : vector<64x64xbf16>, vector<64x32xbf16>, vector<64x32xf32> -> vector<64x32xf32>
    %c1_17 = arith.constant 1 : index
    %c0_18 = arith.constant 0 : index
    %26 = vector.load %arg4[%c1_17, %c0_18] : memref<9x32xf32, #tpu.memory_space<vmem>>, vector<1x32xf32>
    %27 = vector.broadcast %26 : vector<1x32xf32> to vector<64x32xf32>
    %28 = arith.addf %25, %27 : vector<64x32xf32>
    %cst_19 = arith.constant 0.000000e+00 : f32
    %29 = vector.broadcast %cst_19 : f32 to vector<64x32xf32>
    %30 = arith.maximumf %28, %29 : vector<64x32xf32>
    %31 = arith.truncf %30 : vector<64x32xf32> to vector<64x32xbf16>
    %c32 = arith.constant 32 : index
    %c0_20 = arith.constant 0 : index
    %32 = vector.load %arg5[%c32, %c0_20] : memref<256x32xf32, #tpu.memory_space<vmem>>, vector<32x32xf32>
    %33 = arith.truncf %32 : vector<32x32xf32> to vector<32x32xbf16>
    %cst_21 = arith.constant dense<0.000000e+00> : vector<64x32xf32>
    %34 = tpu.matmul %31, %33, %cst_21 {dimension_numbers = #tpu.dot_dimension_numbers<[1], [0], [0], [1], [0, 0, 1, 1], [], []>} : vector<64x32xbf16>, vector<32x32xbf16>, vector<64x32xf32> -> vector<64x32xf32>
    %35 = arith.addf %18, %34 : vector<64x32xf32>
    %c2 = arith.constant 2 : index
    %c0_22 = arith.constant 0 : index
    %c0_23 = arith.constant 0 : index
    %36 = vector.load %arg3[%c2, %c0_22, %c0_23] : memref<6x32x32xf32, #tpu.memory_space<vmem>>, vector<1x32x32xf32>
    %37 = vector.shape_cast %36 : vector<1x32x32xf32> to vector<32x32xf32>
    %38 = arith.truncf %37 : vector<32x32xf32> to vector<32x32xbf16>
    %39 = arith.truncf %30 : vector<64x32xf32> to vector<64x32xbf16>
    %cst_24 = arith.constant dense<0.000000e+00> : vector<64x32xf32>
    %40 = tpu.matmul %39, %38, %cst_24 {dimension_numbers = #tpu.dot_dimension_numbers<[1], [0], [0], [1], [0, 0, 1, 1], [], []>} : vector<64x32xbf16>, vector<32x32xbf16>, vector<64x32xf32> -> vector<64x32xf32>
    %41 = arith.truncf %40 : vector<64x32xf32> to vector<64x32xbf16>
    %cst_25 = arith.constant dense<0.000000e+00> : vector<64x32xf32>
    %42 = tpu.matmul %1, %41, %cst_25 {dimension_numbers = #tpu.dot_dimension_numbers<[1], [0], [0], [1], [0, 0, 1, 1], [], []>} : vector<64x64xbf16>, vector<64x32xbf16>, vector<64x32xf32> -> vector<64x32xf32>
    %c2_26 = arith.constant 2 : index
    %c0_27 = arith.constant 0 : index
    %43 = vector.load %arg4[%c2_26, %c0_27] : memref<9x32xf32, #tpu.memory_space<vmem>>, vector<1x32xf32>
    %44 = vector.broadcast %43 : vector<1x32xf32> to vector<64x32xf32>
    %45 = arith.addf %42, %44 : vector<64x32xf32>
    %cst_28 = arith.constant 0.000000e+00 : f32
    %46 = vector.broadcast %cst_28 : f32 to vector<64x32xf32>
    %47 = arith.maximumf %45, %46 : vector<64x32xf32>
    %48 = arith.truncf %47 : vector<64x32xf32> to vector<64x32xbf16>
    %c64 = arith.constant 64 : index
    %c0_29 = arith.constant 0 : index
    %49 = vector.load %arg5[%c64, %c0_29] : memref<256x32xf32, #tpu.memory_space<vmem>>, vector<32x32xf32>
    %50 = arith.truncf %49 : vector<32x32xf32> to vector<32x32xbf16>
    %cst_30 = arith.constant dense<0.000000e+00> : vector<64x32xf32>
    %51 = tpu.matmul %48, %50, %cst_30 {dimension_numbers = #tpu.dot_dimension_numbers<[1], [0], [0], [1], [0, 0, 1, 1], [], []>} : vector<64x32xbf16>, vector<32x32xbf16>, vector<64x32xf32> -> vector<64x32xf32>
    %52 = arith.addf %35, %51 : vector<64x32xf32>
    %c3 = arith.constant 3 : index
    %c0_31 = arith.constant 0 : index
    %c0_32 = arith.constant 0 : index
    %53 = vector.load %arg3[%c3, %c0_31, %c0_32] : memref<6x32x32xf32, #tpu.memory_space<vmem>>, vector<1x32x32xf32>
    %54 = vector.shape_cast %53 : vector<1x32x32xf32> to vector<32x32xf32>
    %55 = arith.truncf %54 : vector<32x32xf32> to vector<32x32xbf16>
    %56 = arith.truncf %47 : vector<64x32xf32> to vector<64x32xbf16>
    %cst_33 = arith.constant dense<0.000000e+00> : vector<64x32xf32>
    %57 = tpu.matmul %56, %55, %cst_33 {dimension_numbers = #tpu.dot_dimension_numbers<[1], [0], [0], [1], [0, 0, 1, 1], [], []>} : vector<64x32xbf16>, vector<32x32xbf16>, vector<64x32xf32> -> vector<64x32xf32>
    %58 = arith.truncf %57 : vector<64x32xf32> to vector<64x32xbf16>
    %cst_34 = arith.constant dense<0.000000e+00> : vector<64x32xf32>
    %59 = tpu.matmul %1, %58, %cst_34 {dimension_numbers = #tpu.dot_dimension_numbers<[1], [0], [0], [1], [0, 0, 1, 1], [], []>} : vector<64x64xbf16>, vector<64x32xbf16>, vector<64x32xf32> -> vector<64x32xf32>
    %c3_35 = arith.constant 3 : index
    %c0_36 = arith.constant 0 : index
    %60 = vector.load %arg4[%c3_35, %c0_36] : memref<9x32xf32, #tpu.memory_space<vmem>>, vector<1x32xf32>
    %61 = vector.broadcast %60 : vector<1x32xf32> to vector<64x32xf32>
    %62 = arith.addf %59, %61 : vector<64x32xf32>
    %cst_37 = arith.constant 0.000000e+00 : f32
    %63 = vector.broadcast %cst_37 : f32 to vector<64x32xf32>
    %64 = arith.maximumf %62, %63 : vector<64x32xf32>
    %65 = arith.truncf %64 : vector<64x32xf32> to vector<64x32xbf16>
    %c96 = arith.constant 96 : index
    %c0_38 = arith.constant 0 : index
    %66 = vector.load %arg5[%c96, %c0_38] : memref<256x32xf32, #tpu.memory_space<vmem>>, vector<32x32xf32>
    %67 = arith.truncf %66 : vector<32x32xf32> to vector<32x32xbf16>
    %cst_39 = arith.constant dense<0.000000e+00> : vector<64x32xf32>
    %68 = tpu.matmul %65, %67, %cst_39 {dimension_numbers = #tpu.dot_dimension_numbers<[1], [0], [0], [1], [0, 0, 1, 1], [], []>} : vector<64x32xbf16>, vector<32x32xbf16>, vector<64x32xf32> -> vector<64x32xf32>
    %69 = arith.addf %52, %68 : vector<64x32xf32>
    %c4 = arith.constant 4 : index
    %c0_40 = arith.constant 0 : index
    %c0_41 = arith.constant 0 : index
    %70 = vector.load %arg3[%c4, %c0_40, %c0_41] : memref<6x32x32xf32, #tpu.memory_space<vmem>>, vector<1x32x32xf32>
    %71 = vector.shape_cast %70 : vector<1x32x32xf32> to vector<32x32xf32>
    %72 = arith.truncf %71 : vector<32x32xf32> to vector<32x32xbf16>
    %73 = arith.truncf %64 : vector<64x32xf32> to vector<64x32xbf16>
    %cst_42 = arith.constant dense<0.000000e+00> : vector<64x32xf32>
    %74 = tpu.matmul %73, %72, %cst_42 {dimension_numbers = #tpu.dot_dimension_numbers<[1], [0], [0], [1], [0, 0, 1, 1], [], []>} : vector<64x32xbf16>, vector<32x32xbf16>, vector<64x32xf32> -> vector<64x32xf32>
    %75 = arith.truncf %74 : vector<64x32xf32> to vector<64x32xbf16>
    %cst_43 = arith.constant dense<0.000000e+00> : vector<64x32xf32>
    %76 = tpu.matmul %1, %75, %cst_43 {dimension_numbers = #tpu.dot_dimension_numbers<[1], [0], [0], [1], [0, 0, 1, 1], [], []>} : vector<64x64xbf16>, vector<64x32xbf16>, vector<64x32xf32> -> vector<64x32xf32>
    %c4_44 = arith.constant 4 : index
    %c0_45 = arith.constant 0 : index
    %77 = vector.load %arg4[%c4_44, %c0_45] : memref<9x32xf32, #tpu.memory_space<vmem>>, vector<1x32xf32>
    %78 = vector.broadcast %77 : vector<1x32xf32> to vector<64x32xf32>
    %79 = arith.addf %76, %78 : vector<64x32xf32>
    %cst_46 = arith.constant 0.000000e+00 : f32
    %80 = vector.broadcast %cst_46 : f32 to vector<64x32xf32>
    %81 = arith.maximumf %79, %80 : vector<64x32xf32>
    %82 = arith.truncf %81 : vector<64x32xf32> to vector<64x32xbf16>
    %c128 = arith.constant 128 : index
    %c0_47 = arith.constant 0 : index
    %83 = vector.load %arg5[%c128, %c0_47] : memref<256x32xf32, #tpu.memory_space<vmem>>, vector<32x32xf32>
    %84 = arith.truncf %83 : vector<32x32xf32> to vector<32x32xbf16>
    %cst_48 = arith.constant dense<0.000000e+00> : vector<64x32xf32>
    %85 = tpu.matmul %82, %84, %cst_48 {dimension_numbers = #tpu.dot_dimension_numbers<[1], [0], [0], [1], [0, 0, 1, 1], [], []>} : vector<64x32xbf16>, vector<32x32xbf16>, vector<64x32xf32> -> vector<64x32xf32>
    %86 = arith.addf %69, %85 : vector<64x32xf32>
    %c5 = arith.constant 5 : index
    %c0_49 = arith.constant 0 : index
    %c0_50 = arith.constant 0 : index
    %87 = vector.load %arg3[%c5, %c0_49, %c0_50] : memref<6x32x32xf32, #tpu.memory_space<vmem>>, vector<1x32x32xf32>
    %88 = vector.shape_cast %87 : vector<1x32x32xf32> to vector<32x32xf32>
    %89 = arith.truncf %88 : vector<32x32xf32> to vector<32x32xbf16>
    %90 = arith.truncf %81 : vector<64x32xf32> to vector<64x32xbf16>
    %cst_51 = arith.constant dense<0.000000e+00> : vector<64x32xf32>
    %91 = tpu.matmul %90, %89, %cst_51 {dimension_numbers = #tpu.dot_dimension_numbers<[1], [0], [0], [1], [0, 0, 1, 1], [], []>} : vector<64x32xbf16>, vector<32x32xbf16>, vector<64x32xf32> -> vector<64x32xf32>
    %92 = arith.truncf %91 : vector<64x32xf32> to vector<64x32xbf16>
    %cst_52 = arith.constant dense<0.000000e+00> : vector<64x32xf32>
    %93 = tpu.matmul %1, %92, %cst_52 {dimension_numbers = #tpu.dot_dimension_numbers<[1], [0], [0], [1], [0, 0, 1, 1], [], []>} : vector<64x64xbf16>, vector<64x32xbf16>, vector<64x32xf32> -> vector<64x32xf32>
    %c5_53 = arith.constant 5 : index
    %c0_54 = arith.constant 0 : index
    %94 = vector.load %arg4[%c5_53, %c0_54] : memref<9x32xf32, #tpu.memory_space<vmem>>, vector<1x32xf32>
    %95 = vector.broadcast %94 : vector<1x32xf32> to vector<64x32xf32>
    %96 = arith.addf %93, %95 : vector<64x32xf32>
    %cst_55 = arith.constant 0.000000e+00 : f32
    %97 = vector.broadcast %cst_55 : f32 to vector<64x32xf32>
    %98 = arith.maximumf %96, %97 : vector<64x32xf32>
    %99 = arith.truncf %98 : vector<64x32xf32> to vector<64x32xbf16>
    %c160 = arith.constant 160 : index
    %c0_56 = arith.constant 0 : index
    %100 = vector.load %arg5[%c160, %c0_56] : memref<256x32xf32, #tpu.memory_space<vmem>>, vector<32x32xf32>
    %101 = arith.truncf %100 : vector<32x32xf32> to vector<32x32xbf16>
    %cst_57 = arith.constant dense<0.000000e+00> : vector<64x32xf32>
    %102 = tpu.matmul %99, %101, %cst_57 {dimension_numbers = #tpu.dot_dimension_numbers<[1], [0], [0], [1], [0, 0, 1, 1], [], []>} : vector<64x32xbf16>, vector<32x32xbf16>, vector<64x32xf32> -> vector<64x32xf32>
    %103 = arith.addf %86, %102 : vector<64x32xf32>
    %c6 = arith.constant 6 : index
    %c0_58 = arith.constant 0 : index
    %104 = vector.load %arg4[%c6, %c0_58] : memref<9x32xf32, #tpu.memory_space<vmem>>, vector<1x32xf32>
    %105 = vector.broadcast %104 : vector<1x32xf32> to vector<64x32xf32>
    %106 = arith.addf %103, %105 : vector<64x32xf32>
    %cst_59 = arith.constant 0.000000e+00 : f32
    %107 = vector.broadcast %cst_59 : f32 to vector<64x32xf32>
    %108 = arith.maximumf %106, %107 : vector<64x32xf32>
    %c0_60 = arith.constant 0 : index
    %c0_61 = arith.constant 0 : index
    %109 = vector.load %arg2[%c0_60, %c0_61] : memref<4x64xf32, #tpu.memory_space<vmem>>, vector<4x64xf32>
    %110 = arith.truncf %109 : vector<4x64xf32> to vector<4x64xbf16>
    %111 = arith.truncf %108 : vector<64x32xf32> to vector<64x32xbf16>
    %cst_62 = arith.constant dense<0.000000e+00> : vector<4x32xf32>
    %112 = tpu.matmul %110, %111, %cst_62 {dimension_numbers = #tpu.dot_dimension_numbers<[1], [0], [0], [1], [0, 0, 1, 1], [], []>} : vector<4x64xbf16>, vector<64x32xbf16>, vector<4x32xf32> -> vector<4x32xf32>
    %c192 = arith.constant 192 : index
    %c0_63 = arith.constant 0 : index
    %113 = vector.load %arg5[%c192, %c0_63] : memref<256x32xf32, #tpu.memory_space<vmem>>, vector<32x32xf32>
    %114 = arith.truncf %113 : vector<32x32xf32> to vector<32x32xbf16>
    %115 = arith.truncf %112 : vector<4x32xf32> to vector<4x32xbf16>
    %cst_64 = arith.constant dense<0.000000e+00> : vector<4x32xf32>
    %116 = tpu.matmul %115, %114, %cst_64 {dimension_numbers = #tpu.dot_dimension_numbers<[1], [0], [0], [1], [0, 0, 1, 1], [], []>} : vector<4x32xbf16>, vector<32x32xbf16>, vector<4x32xf32> -> vector<4x32xf32>
    %c7 = arith.constant 7 : index
    %c0_65 = arith.constant 0 : index
    %117 = vector.load %arg4[%c7, %c0_65] : memref<9x32xf32, #tpu.memory_space<vmem>>, vector<1x32xf32>
    %118 = vector.broadcast %117 : vector<1x32xf32> to vector<4x32xf32>
    %119 = arith.addf %116, %118 : vector<4x32xf32>
    %cst_66 = arith.constant 0.000000e+00 : f32
    %120 = vector.broadcast %cst_66 : f32 to vector<4x32xf32>
    %121 = arith.maximumf %119, %120 : vector<4x32xf32>
    %c224 = arith.constant 224 : index
    %c0_67 = arith.constant 0 : index
    %122 = vector.load %arg5[%c224, %c0_67] : memref<256x32xf32, #tpu.memory_space<vmem>>, vector<32x8xf32>
    %123 = arith.truncf %122 : vector<32x8xf32> to vector<32x8xbf16>
    %124 = arith.truncf %121 : vector<4x32xf32> to vector<4x32xbf16>
    %cst_68 = arith.constant dense<0.000000e+00> : vector<4x8xf32>
    %125 = tpu.matmul %124, %123, %cst_68 {dimension_numbers = #tpu.dot_dimension_numbers<[1], [0], [0], [1], [0, 0, 1, 1], [], []>} : vector<4x32xbf16>, vector<32x8xbf16>, vector<4x8xf32> -> vector<4x8xf32>
    %c8 = arith.constant 8 : index
    %c0_69 = arith.constant 0 : index
    %126 = vector.load %arg4[%c8, %c0_69] : memref<9x32xf32, #tpu.memory_space<vmem>>, vector<1x8xf32>
    %127 = vector.broadcast %126 : vector<1x8xf32> to vector<4x8xf32>
    %128 = arith.addf %125, %127 : vector<4x8xf32>
    %cst_70 = arith.constant dense<0xFF800000> : vector<4xf32>
    %129 = vector.multi_reduction <maximumf>, %128, %cst_70 [1] : vector<4x8xf32> to vector<4xf32>
    %130 = vector.shape_cast %129 : vector<4xf32> to vector<4x1xf32>
    %131 = vector.broadcast %130 : vector<4x1xf32> to vector<4x8xf32>
    %132 = arith.subf %128, %131 : vector<4x8xf32>
    %133 = math.exp %132 : vector<4x8xf32>
    %cst_71 = arith.constant dense<0.000000e+00> : vector<4xf32>
    %134 = vector.multi_reduction <add>, %133, %cst_71 [1] : vector<4x8xf32> to vector<4xf32>
    %135 = vector.shape_cast %134 : vector<4xf32> to vector<4x1xf32>
    %136 = vector.broadcast %135 : vector<4x1xf32> to vector<4x8xf32>
    %137 = arith.divf %133, %136 : vector<4x8xf32>
    %c0_72 = arith.constant 0 : index
    %c0_73 = arith.constant 0 : index
    %138 = vector.load %arg6[%c0_72, %c0_73] : memref<4x8xf32, #tpu.memory_space<vmem>>, vector<4x8xf32>
    tpu.vector_store %arg6[%c0_72, %c0_73], %137 {strides = array<i32>} : memref<4x8xf32, #tpu.memory_space<vmem>>, vector<4x8xf32>,
    return
  }
}

</mosaic_0001>

<llo_original>
// kernel: tpu_custom_call.1
$region0: #{tpu_custom_call.1}
  #allocation0 [shape = 'u32[]', space=smem, size = 0x4, offset = 0x4, fixed_abs, tag = 'smem constant byte address 0x4 - core index']
  #allocation1 [shape = 'u32[144,128]{1,0:T(1,128)}', space=vmem, size = 0x12000, scoped, tag = 'internal scratch']
  %s0 = inlined_call_operand.vmem [shape: f32[64,64], index: 0, kind: input, shape index: {}]
  %s1 = inlined_call_operand.vmem [shape: f32[64,16], index: 1, kind: input, shape index: {}]
  %s2 = inlined_call_operand.vmem [shape: f32[4,64], index: 2, kind: input, shape index: {}]
  %s3 = inlined_call_operand.vmem [shape: f32[6,32,32], index: 3, kind: input, shape index: {}]
  %s4 = inlined_call_operand.vmem [shape: f32[9,32], index: 4, kind: input, shape index: {}]
  %s5 = inlined_call_operand.vmem [shape: f32[256,32], index: 5, kind: input, shape index: {}]
  %s6 = inlined_call_operand.hbm [shape: f32[4,8], index: 6, kind: output, shape index: {}]
  %s7 = sld [smem:[#allocation0]]
  $region34: #{tpu_custom_call.1} parent=0
    _
  %s9 = ssub.s32 1, %s7
  %s10 = scalar_select 0, %s9, %s7
  $region1: #{tpu_custom_call.1} parent=0
    #allocation2 [shape = 'u8[2048]{0}', space=vmem, size = 0x800, scoped, tag = 'output window, operand 0, single buffered']
    #allocation3 [shape = 's32[1]{0}', space=sflag, size = 0x4, scoped, tag = 'scoped memory for tpu_custom_call.1']
    %11 = vsyncpa [#allocation3], 0
    // Predicated region
    $region2: #{tpu_custom_call.1} parent=1 // pred_check
      _
    $region3: #{tpu_custom_call.1} parent=1 // pred_check_branch
      %13 = sbr.rel (0) target = $region5
    $region4: #{tpu_custom_call.1} parent=1 // pred_region
      _
    $region5: #{tpu_custom_call.1} parent=1 // pred_fallthru
      _
    // Predicated region
    $region6: #{tpu_custom_call.1} parent=1 // pred_check
      _
    $region7: #{tpu_custom_call.1} parent=1 // pred_check_branch
      %15 = sbr.rel (0) target = $region9
    $region8: #{tpu_custom_call.1} parent=1 // pred_region
      _
    $region9: #{tpu_custom_call.1} parent=1 // pred_fallthru
      _
    // Predicated region
    $region10: #{tpu_custom_call.1} parent=1 // pred_check
      _
    $region11: #{tpu_custom_call.1} parent=1 // pred_check_branch
      %17 = sbr.rel (0) target = $region13
    $region12: #{tpu_custom_call.1} parent=1 // pred_region
      _
    $region13: #{tpu_custom_call.1} parent=1 // pred_fallthru
      _
    // Predicated region
    $region14: #{tpu_custom_call.1} parent=1 // pred_check
      _
    $region15: #{tpu_custom_call.1} parent=1 // pred_check_branch
      %19 = sbr.rel (0) target = $region17
    $region16: #{tpu_custom_call.1} parent=1 // pred_region
      _
    $region17: #{tpu_custom_call.1} parent=1 // pred_fallthru
      _
    // Predicated region
    $region18: #{tpu_custom_call.1} parent=1 // pred_check
      _
    $region19: #{tpu_custom_call.1} parent=1 // pred_check_branch
      %21 = sbr.rel (0) target = $region21
    $region20: #{tpu_custom_call.1} parent=1 // pred_region
      _
    $region21: #{tpu_custom_call.1} parent=1 // pred_fallthru
      _
    // Predicated region
    $region22: #{tpu_custom_call.1} parent=1 // pred_check
      _
    $region23: #{tpu_custom_call.1} parent=1 // pred_check_branch
      %23 = sbr.rel (0) target = $region25
    $region24: #{tpu_custom_call.1} parent=1 // pred_region
      _
    $region25: #{tpu_custom_call.1} parent=1 // pred_fallthru
      _
    %v25 = vld [vmem:[%s0] sm:$0xff]
    %v26 = vld [vmem:[%s0 + $0x8] sm:$0xff]
    %v27 = vld [vmem:[%s0 + $0x10] sm:$0xff]
    %v28 = vld [vmem:[%s0 + $0x18] sm:$0xff]
    %v29 = vld [vmem:[%s0 + $0x20] sm:$0xff]
    %v30 = vld [vmem:[%s0 + $0x28] sm:$0xff]
    %v31 = vld [vmem:[%s0 + $0x30] sm:$0xff]
    %v32 = vld [vmem:[%s0 + $0x38] sm:$0xff]
    %v33 = vpack.c.bf16 %v26, %v25
    %v34 = vpack.c.bf16 %v28, %v27
    %v35 = vpack.c.bf16 %v30, %v29
    %v36 = vpack.c.bf16 %v32, %v31
    %v37 = vld [vmem:[%s1] sm:$0xff]
    %v38 = vld [vmem:[%s1 + $0x8] sm:$0xff]
    %v39 = vld [vmem:[%s1 + $0x10] sm:$0xff]
    %v40 = vld [vmem:[%s1 + $0x18] sm:$0xff]
    %v41 = vld [vmem:[%s1 + $0x20] sm:$0xff]
    %v42 = vld [vmem:[%s1 + $0x28] sm:$0xff]
    %v43 = vld [vmem:[%s1 + $0x30] sm:$0xff]
    %v44 = vld [vmem:[%s1 + $0x38] sm:$0xff]
    %v45 = vpack.c.bf16 %v38, %v37
    %v46 = vpack.c.bf16 %v40, %v39
    %v47 = vpack.c.bf16 %v42, %v41
    %v48 = vpack.c.bf16 %v44, %v43
    %vm49 = vcmask 523264
    %v51 = vsel %vm49, %v33, 0
    %v54 = vsel %vm49, %v34, 0
    %v57 = vsel %vm49, %v35, 0
    %v60 = vsel %vm49, %v36, 0
    %62 = vmatprep.subr.bf16.mxu0 0
    %63 = vmatpush1.bf16.msra.mxu0 %v45
    %64 = vmatprep.subr.bf16.mxu0 0
    %65 = vmatpush1.bf16.msra.mxu0 %v46
    %66 = vmatprep.subr.bf16.mxu0 0
    %67 = vmatpush1.bf16.msra.mxu0 %v47
    %68 = vmatprep.subr.bf16.mxu0 0
    %69 = vmatpush1.bf16.msra.mxu0 %v48
    %70 = vmatprep.subr.bf16.mxu0 0
    %71 = vmatpush1.bf16.msra.mxu0 0
    %72 = vmatprep.subr.bf16.mxu0 0
    %73 = vmatpush1.bf16.msra.mxu0 0
    %74 = vmatprep.subr.bf16.mxu0 0
    %75 = vmatpush1.bf16.msra.mxu0 0
    %76 = vmatprep.subr.bf16.mxu0 0
    %77 = vmatpush1.bf16.msra.mxu0 0
    %78 = vmatprep.subr.bf16.mxu0 0
    %79 = vmatpush1.bf16.msra.mxu0 0
    %80 = vmatprep.subr.bf16.mxu0 0
    %81 = vmatpush1.bf16.msra.mxu0 0
    %82 = vmatprep.subr.bf16.mxu0 0
    %83 = vmatpush1.bf16.msra.mxu0 0
    %84 = vmatprep.subr.bf16.mxu0 0
    %85 = vmatpush1.bf16.msra.mxu0 0
    %86 = vmatprep.subr.bf16.mxu0 0
    %87 = vmatpush1.bf16.msra.mxu0 0
    %88 = vmatprep.subr.bf16.mxu0 0
    %89 = vmatpush1.bf16.msra.mxu0 0
    %90 = vmatprep.subr.bf16.mxu0 0
    %91 = vmatpush1.bf16.msra.mxu0 0
    %92 = vmatprep.subr.bf16.mxu0 0
    %93 = vmatpush1.bf16.msra.mxu0 0
    %94 = vmatprep.mubr.bf16.mxu0 0
    %95 = vmatmul.mubr.bf16.gmra.mrb[0].mxu0 %v51
    %v96 = vpop.f32.mrb[0].mxu0
    %v97 = vadd.f32 0.0, %v96
    %v98 = vpop.f32.mrb[0].mxu0
    %v99 = vpop.f32.mrb[0].mxu0
    %v100 = vadd.f32 0.0, %v99
    %v101 = vpop.f32.mrb[0].mxu0
    %102 = vmatprep.mubr.bf16.mxu0 0
    %103 = vmatmul.mubr.bf16.gmra.mrb[0].mxu0 %v54
    %v104 = vpop.f32.mrb[0].mxu0
    %v105 = vadd.f32 0.0, %v104
    %v106 = vpop.f32.mrb[0].mxu0
    %v107 = vpop.f32.mrb[0].mxu0
    %v108 = vadd.f32 0.0, %v107
    %v109 = vpop.f32.mrb[0].mxu0
    %110 = vmatprep.mubr.bf16.mxu0 0
    %111 = vmatmul.mubr.bf16.gmra.mrb[0].mxu0 %v57
    %v112 = vpop.f32.mrb[0].mxu0
    %v113 = vadd.f32 0.0, %v112
    %v114 = vpop.f32.mrb[0].mxu0
    %v115 = vpop.f32.mrb[0].mxu0
    %v116 = vadd.f32 0.0, %v115
    %v117 = vpop.f32.mrb[0].mxu0
    %118 = vmatprep.mubr.bf16.mxu0 0
    %119 = vmatmul.mubr.bf16.gmra.mrb[0].mxu0 %v60
    %v120 = vpop.f32.mrb[0].mxu0
    %v121 = vadd.f32 0.0, %v120
    %v122 = vpop.f32.mrb[0].mxu0
    %v123 = vpop.f32.mrb[0].mxu0
    %v124 = vadd.f32 0.0, %v123
    %v125 = vpop.f32.mrb[0].mxu0
    %126 = vdwg.mxu0
    %v127 = vld [vmem:[%s3] sm:$0xff]
    %v128 = vld [vmem:[%s3 + $0x8] sm:$0xff]
    %v129 = vpack.c.bf16 %v128, %v127
    %v130 = vpack.c.bf16 %v100, %v97
    %v131 = vpack.c.bf16 %v108, %v105
    %v132 = vpack.c.bf16 %v116, %v113
    %v133 = vpack.c.bf16 %v124, %v121
    %v134 = vld [vmem:[%s4] sm:$0x1]
    %v135 = vlaneseq
    %v136 = vshrl.u32 %v135, 7
    %v137 = vsub.s32 0, %v136
    %v138 = vrot.slane %v134, %v137
    %vm139 = vcmask 130048
    %v141 = vsel %vm139, %v130, 0
    %v144 = vsel %vm139, %v131, 0
    %v147 = vsel %vm139, %v132, 0
    %v150 = vsel %vm139, %v133, 0
    %152 = vmatprep.subr.bf16.mxu0 0
    %153 = vmatpush1.bf16.msra.mxu0 %v129
    %154 = vmatprep.subr.bf16.mxu0 0
    %155 = vmatpush1.bf16.msra.mxu0 0
    %156 = vmatprep.subr.bf16.mxu0 0
    %157 = vmatpush1.bf16.msra.mxu0 0
    %158 = vmatprep.subr.bf16.mxu0 0
    %159 = vmatpush1.bf16.msra.mxu0 0
    %160 = vmatprep.subr.bf16.mxu0 0
    %161 = vmatpush1.bf16.msra.mxu0 0
    %162 = vmatprep.subr.bf16.mxu0 0
    %163 = vmatpush1.bf16.msra.mxu0 0
    %164 = vmatprep.subr.bf16.mxu0 0
    %165 = vmatpush1.bf16.msra.mxu0 0
    %166 = vmatprep.subr.bf16.mxu0 0
    %167 = vmatpush1.bf16.msra.mxu0 0
    %168 = vmatprep.subr.bf16.mxu0 0
    %169 = vmatpush1.bf16.msra.mxu0 0
    %170 = vmatprep.subr.bf16.mxu0 0
    %171 = vmatpush1.bf16.msra.mxu0 0
    %172 = vmatprep.subr.bf16.mxu0 0
    %173 = vmatpush1.bf16.msra.mxu0 0
    %174 = vmatprep.subr.bf16.mxu0 0
    %175 = vmatpush1.bf16.msra.mxu0 0
    %176 = vmatprep.subr.bf16.mxu0 0
    %177 = vmatpush1.bf16.msra.mxu0 0
    %178 = vmatprep.subr.bf16.mxu0 0
    %179 = vmatpush1.bf16.msra.mxu0 0
    %180 = vmatprep.subr.bf16.mxu0 0
    %181 = vmatpush1.bf16.msra.mxu0 0
    %182 = vmatprep.subr.bf16.mxu0 0
    %183 = vmatpush1.bf16.msra.mxu0 0
    %184 = vmatprep.mubr.bf16.mxu0 0
    %185 = vmatmul.mubr.bf16.gmra.mrb[0].mxu0 %v141
    %v186 = vpop.f32.mrb[0].mxu0
    %v187 = vadd.f32 %v138, %v186
    %v188 = vpop.f32.mrb[0].mxu0
    %v189 = vpop.f32.mrb[0].mxu0
    %v190 = vadd.f32 %v138, %v189
    %v191 = vpop.f32.mrb[0].mxu0
    %192 = vmatprep.mubr.bf16.mxu0 0
    %193 = vmatmul.mubr.bf16.gmra.mrb[0].mxu0 %v144
    %v194 = vpop.f32.mrb[0].mxu0
    %v195 = vadd.f32 %v138, %v194
    %v196 = vpop.f32.mrb[0].mxu0
    %v197 = vpop.f32.mrb[0].mxu0
    %v198 = vadd.f32 %v138, %v197
    %v199 = vpop.f32.mrb[0].mxu0
    %200 = vmatprep.mubr.bf16.mxu0 0
    %201 = vmatmul.mubr.bf16.gmra.mrb[0].mxu0 %v147
    %v202 = vpop.f32.mrb[0].mxu0
    %v203 = vadd.f32 %v138, %v202
    %v204 = vpop.f32.mrb[0].mxu0
    %v205 = vpop.f32.mrb[0].mxu0
    %v206 = vadd.f32 %v138, %v205
    %v207 = vpop.f32.mrb[0].mxu0
    %208 = vmatprep.mubr.bf16.mxu0 0
    %209 = vmatmul.mubr.bf16.gmra.mrb[0].mxu0 %v150
    %v210 = vpop.f32.mrb[0].mxu0
    %v211 = vadd.f32 %v138, %v210
    %v212 = vpop.f32.mrb[0].mxu0
    %v213 = vpop.f32.mrb[0].mxu0
    %v214 = vadd.f32 %v138, %v213
    %v215 = vpop.f32.mrb[0].mxu0
    %216 = vdwg.mxu0
    %v217 = vmax.f32 %v187, 0.0
    %v218 = vmax.f32 %v190, 0.0
    %v219 = vmax.f32 %v195, 0.0
    %v220 = vmax.f32 %v198, 0.0
    %v221 = vmax.f32 %v203, 0.0
    %v222 = vmax.f32 %v206, 0.0
    %v223 = vmax.f32 %v211, 0.0
    %v224 = vmax.f32 %v214, 0.0
    %v225 = vpack.c.bf16 %v218, %v217
    %v226 = vpack.c.bf16 %v220, %v219
    %v227 = vpack.c.bf16 %v222, %v221
    %v228 = vpack.c.bf16 %v224, %v223
    %v229 = vld [vmem:[%s5] sm:$0xff]
    %v230 = vld [vmem:[%s5 + $0x8] sm:$0xff]
    %v231 = vld [vmem:[%s5 + $0x10] sm:$0xff]
    %v232 = vld [vmem:[%s5 + $0x18] sm:$0xff]
    %v233 = vpack.c.bf16 %v230, %v229
    %v234 = vpack.c.bf16 %v232, %v231
    %s235 = scalar_lea.vmem %s3, 32
    %v236 = vld [vmem:[%s235] sm:$0xff]
    %v237 = vld [vmem:[%s235 + $0x8] sm:$0xff]
    %v238 = vld [vmem:[%s235 + $0x10] sm:$0xff]
    %v239 = vld [vmem:[%s235 + $0x18] sm:$0xff]
    %v240 = vpack.c.bf16 %v237, %v236
    %v241 = vpack.c.bf16 %v239, %v238
    %vm242 = vcmask 261120
    %v244 = vsel %vm242, %v225, 0
    %v247 = vsel %vm242, %v226, 0
    %v250 = vsel %vm242, %v227, 0
    %v253 = vsel %vm242, %v228, 0
    %255 = vmatprep.subr.bf16.mxu0 0
    %256 = vmatpush1.bf16.msra.mxu0 %v240
    %257 = vmatprep.subr.bf16.mxu0 0
    %258 = vmatpush1.bf16.msra.mxu0 %v241
    %259 = vmatprep.subr.bf16.mxu0 0
    %260 = vmatpush1.bf16.msra.mxu0 0
    %261 = vmatprep.subr.bf16.mxu0 0
    %262 = vmatpush1.bf16.msra.mxu0 0
    %263 = vmatprep.subr.bf16.mxu0 0
    %264 = vmatpush1.bf16.msra.mxu0 0
    %265 = vmatprep.subr.bf16.mxu0 0
    %266 = vmatpush1.bf16.msra.mxu0 0
    %267 = vmatprep.subr.bf16.mxu0 0
    %268 = vmatpush1.bf16.msra.mxu0 0
    %269 = vmatprep.subr.bf16.mxu0 0
    %270 = vmatpush1.bf16.msra.mxu0 0
    %271 = vmatprep.subr.bf16.mxu0 0
    %272 = vmatpush1.bf16.msra.mxu0 0
    %273 = vmatprep.subr.bf16.mxu0 0
    %274 = vmatpush1.bf16.msra.mxu0 0
    %275 = vmatprep.subr.bf16.mxu0 0
    %276 = vmatpush1.bf16.msra.mxu0 0
    %277 = vmatprep.subr.bf16.mxu0 0
    %278 = vmatpush1.bf16.msra.mxu0 0
    %279 = vmatprep.subr.bf16.mxu0 0
    %280 = vmatpush1.bf16.msra.mxu0 0
    %281 = vmatprep.subr.bf16.mxu0 0
    %282 = vmatpush1.bf16.msra.mxu0 0
    %283 = vmatprep.subr.bf16.mxu0 0
    %284 = vmatpush1.bf16.msra.mxu0 0
    %285 = vmatprep.subr.bf16.mxu0 0
    %286 = vmatpush1.bf16.msra.mxu0 0
    %287 = vmatprep.mubr.bf16.mxu0 0
    %288 = vmatmul.mubr.bf16.gmra.mrb[0].mxu0 %v244
    %v289 = vpop.f32.mrb[0].mxu0
    %v290 = vadd.f32 0.0, %v289
    %v291 = vpop.f32.mrb[0].mxu0
    %v292 = vpop.f32.mrb[0].mxu0
    %v293 = vadd.f32 0.0, %v292
    %v294 = vpop.f32.mrb[0].mxu0
    %295 = vmatprep.mubr.bf16.mxu0 0
    %296 = vmatmul.mubr.bf16.gmra.mrb[0].mxu0 %v247
    %v297 = vpop.f32.mrb[0].mxu0
    %v298 = vadd.f32 0.0, %v297
    %v299 = vpop.f32.mrb[0].mxu0
    %v300 = vpop.f32.mrb[0].mxu0
    %v301 = vadd.f32 0.0, %v300
    %v302 = vpop.f32.mrb[0].mxu0
    %303 = vmatprep.mubr.bf16.mxu0 0
    %304 = vmatmul.mubr.bf16.gmra.mrb[0].mxu0 %v250
    %v305 = vpop.f32.mrb[0].mxu0
    %v306 = vadd.f32 0.0, %v305
    %v307 = vpop.f32.mrb[0].mxu0
    %v308 = vpop.f32.mrb[0].mxu0
    %v309 = vadd.f32 0.0, %v308
    %v310 = vpop.f32.mrb[0].mxu0
    %311 = vmatprep.mubr.bf16.mxu0 0
    %312 = vmatmul.mubr.bf16.gmra.mrb[0].mxu0 %v253
    %v313 = vpop.f32.mrb[0].mxu0
    %v314 = vadd.f32 0.0, %v313
    %v315 = vpop.f32.mrb[0].mxu0
    %v316 = vpop.f32.mrb[0].mxu0
    %v317 = vadd.f32 0.0, %v316
    %v318 = vpop.f32.mrb[0].mxu0
    %319 = vdwg.mxu0
    %v320 = vpack.c.bf16 %v293, %v290
    %v321 = vpack.c.bf16 %v301, %v298
    %v322 = vpack.c.bf16 %v309, %v306
    %v323 = vpack.c.bf16 %v317, %v314
    %v324 = vld [vmem:[%s4 + $0x1] sm:$0x1]
    %v325 = vlaneseq
    %v326 = vshrl.u32 %v325, 7
    %v327 = vsub.s32 0, %v326
    %v328 = vrot.slane %v324, %v327
    %329 = vmatprep.subr.bf16.mxu0 0
    %330 = vmatpush1.bf16.msra.mxu0 %v320
    %331 = vmatprep.subr.bf16.mxu0 0
    %332 = vmatpush1.bf16.msra.mxu0 %v321
    %333 = vmatprep.subr.bf16.mxu0 0
    %334 = vmatpush1.bf16.msra.mxu0 %v322
    %335 = vmatprep.subr.bf16.mxu0 0
    %336 = vmatpush1.bf16.msra.mxu0 %v323
    %337 = vmatprep.subr.bf16.mxu0 0
    %338 = vmatpush1.bf16.msra.mxu0 0
    %339 = vmatprep.subr.bf16.mxu0 0
    %340 = vmatpush1.bf16.msra.mxu0 0
    %341 = vmatprep.subr.bf16.mxu0 0
    %342 = vmatpush1.bf16.msra.mxu0 0
    %343 = vmatprep.subr.bf16.mxu0 0
    %344 = vmatpush1.bf16.msra.mxu0 0
    %345 = vmatprep.subr.bf16.mxu0 0
    %346 = vmatpush1.bf16.msra.mxu0 0
    %347 = vmatprep.subr.bf16.mxu0 0
    %348 = vmatpush1.bf16.msra.mxu0 0
    %349 = vmatprep.subr.bf16.mxu0 0
    %350 = vmatpush1.bf16.msra.mxu0 0
    %351 = vmatprep.subr.bf16.mxu0 0
    %352 = vmatpush1.bf16.msra.mxu0 0
    %353 = vmatprep.subr.bf16.mxu0 0
    %354 = vmatpush1.bf16.msra.mxu0 0
    %355 = vmatprep.subr.bf16.mxu0 0
    %356 = vmatpush1.bf16.msra.mxu0 0
    %357 = vmatprep.subr.bf16.mxu0 0
    %358 = vmatpush1.bf16.msra.mxu0 0
    %359 = vmatprep.subr.bf16.mxu0 0
    %360 = vmatpush1.bf16.msra.mxu0 0
    %361 = vmatprep.mubr.bf16.mxu0 0
    %362 = vmatmul.mubr.bf16.gmra.mrb[0].mxu0 %v51
    %v363 = vpop.f32.mrb[0].mxu0
    %v364 = vadd.f32 %v328, %v363
    %v365 = vpop.f32.mrb[0].mxu0
    %v366 = vpop.f32.mrb[0].mxu0
    %v367 = vadd.f32 %v328, %v366
    %v368 = vpop.f32.mrb[0].mxu0
    %369 = vmatprep.mubr.bf16.mxu0 0
    %370 = vmatmul.mubr.bf16.gmra.mrb[0].mxu0 %v54
    %v371 = vpop.f32.mrb[0].mxu0
    %v372 = vadd.f32 %v328, %v371
    %v373 = vpop.f32.mrb[0].mxu0
    %v374 = vpop.f32.mrb[0].mxu0
    %v375 = vadd.f32 %v328, %v374
    %v376 = vpop.f32.mrb[0].mxu0
    %377 = vmatprep.mubr.bf16.mxu0 0
    %378 = vmatmul.mubr.bf16.gmra.mrb[0].mxu0 %v57
    %v379 = vpop.f32.mrb[0].mxu0
    %v380 = vadd.f32 %v328, %v379
    %v381 = vpop.f32.mrb[0].mxu0
    %v382 = vpop.f32.mrb[0].mxu0
    %v383 = vadd.f32 %v328, %v382
    %v384 = vpop.f32.mrb[0].mxu0
    %385 = vmatprep.mubr.bf16.mxu0 0
    %386 = vmatmul.mubr.bf16.gmra.mrb[0].mxu0 %v60
    %v387 = vpop.f32.mrb[0].mxu0
    %v388 = vadd.f32 %v328, %v387
    %v389 = vpop.f32.mrb[0].mxu0
    %v390 = vpop.f32.mrb[0].mxu0
    %v391 = vadd.f32 %v328, %v390
    %v392 = vpop.f32.mrb[0].mxu0
    %393 = vdwg.mxu0
    %v394 = vmax.f32 %v364, 0.0
    %v395 = vmax.f32 %v367, 0.0
    %v396 = vmax.f32 %v372, 0.0
    %v397 = vmax.f32 %v375, 0.0
    %v398 = vmax.f32 %v380, 0.0
    %v399 = vmax.f32 %v383, 0.0
    %v400 = vmax.f32 %v388, 0.0
    %v401 = vmax.f32 %v391, 0.0
    %v402 = vpack.c.bf16 %v395, %v394
    %v403 = vpack.c.bf16 %v397, %v396
    %v404 = vpack.c.bf16 %v399, %v398
    %v405 = vpack.c.bf16 %v401, %v400
    %v406 = vld [vmem:[%s5 + $0x20] sm:$0xff]
    %v407 = vld [vmem:[%s5 + $0x28] sm:$0xff]
    %v408 = vld [vmem:[%s5 + $0x30] sm:$0xff]
    %v409 = vld [vmem:[%s5 + $0x38] sm:$0xff]
    %v410 = vpack.c.bf16 %v407, %v406
    %v411 = vpack.c.bf16 %v409, %v408
    %v413 = vsel %vm242, %v402, 0
    %v416 = vsel %vm242, %v403, 0
    %v419 = vsel %vm242, %v404, 0
    %v422 = vsel %vm242, %v405, 0
    %424 = vmatprep.subr.bf16.mxu0 0
    %425 = vmatpush1.bf16.msra.mxu0 %v410
    %426 = vmatprep.subr.bf16.mxu0 0
    %427 = vmatpush1.bf16.msra.mxu0 %v411
    %428 = vmatprep.subr.bf16.mxu0 0
    %429 = vmatpush1.bf16.msra.mxu0 0
    %430 = vmatprep.subr.bf16.mxu0 0
    %431 = vmatpush1.bf16.msra.mxu0 0
    %432 = vmatprep.subr.bf16.mxu0 0
    %433 = vmatpush1.bf16.msra.mxu0 0
    %434 = vmatprep.subr.bf16.mxu0 0
    %435 = vmatpush1.bf16.msra.mxu0 0
    %436 = vmatprep.subr.bf16.mxu0 0
    %437 = vmatpush1.bf16.msra.mxu0 0
    %438 = vmatprep.subr.bf16.mxu0 0
    %439 = vmatpush1.bf16.msra.mxu0 0
    %440 = vmatprep.subr.bf16.mxu0 0
    %441 = vmatpush1.bf16.msra.mxu0 0
    %442 = vmatprep.subr.bf16.mxu0 0
    %443 = vmatpush1.bf16.msra.mxu0 0
    %444 = vmatprep.subr.bf16.mxu0 0
    %445 = vmatpush1.bf16.msra.mxu0 0
    %446 = vmatprep.subr.bf16.mxu0 0
    %447 = vmatpush1.bf16.msra.mxu0 0
    %448 = vmatprep.subr.bf16.mxu0 0
    %449 = vmatpush1.bf16.msra.mxu0 0
    %450 = vmatprep.subr.bf16.mxu0 0
    %451 = vmatpush1.bf16.msra.mxu0 0
    %452 = vmatprep.subr.bf16.mxu0 0
    %453 = vmatpush1.bf16.msra.mxu0 0
    %454 = vmatprep.subr.bf16.mxu0 0
    %455 = vmatpush1.bf16.msra.mxu0 0
    %456 = vmatprep.mubr.bf16.mxu0 0
    %457 = vmatmul.mubr.bf16.gmra.mrb[0].mxu0 %v413
    %v458 = vpop.f32.mrb[0].mxu0
    %v459 = vadd.f32 0.0, %v458
    %v460 = vpop.f32.mrb[0].mxu0
    %v461 = vpop.f32.mrb[0].mxu0
    %v462 = vadd.f32 0.0, %v461
    %v463 = vpop.f32.mrb[0].mxu0
    %464 = vmatprep.mubr.bf16.mxu0 0
    %465 = vmatmul.mubr.bf16.gmra.mrb[0].mxu0 %v416
    %v466 = vpop.f32.mrb[0].mxu0
    %v467 = vadd.f32 0.0, %v466
    %v468 = vpop.f32.mrb[0].mxu0
    %v469 = vpop.f32.mrb[0].mxu0
    %v470 = vadd.f32 0.0, %v469
    %v471 = vpop.f32.mrb[0].mxu0
    %472 = vmatprep.mubr.bf16.mxu0 0
    %473 = vmatmul.mubr.bf16.gmra.mrb[0].mxu0 %v419
    %v474 = vpop.f32.mrb[0].mxu0
    %v475 = vadd.f32 0.0, %v474
    %v476 = vpop.f32.mrb[0].mxu0
    %v477 = vpop.f32.mrb[0].mxu0
    %v478 = vadd.f32 0.0, %v477
    %v479 = vpop.f32.mrb[0].mxu0
    %480 = vmatprep.mubr.bf16.mxu0 0
    %481 = vmatmul.mubr.bf16.gmra.mrb[0].mxu0 %v422
    %v482 = vpop.f32.mrb[0].mxu0
    %v483 = vadd.f32 0.0, %v482
    %v484 = vpop.f32.mrb[0].mxu0
    %v485 = vpop.f32.mrb[0].mxu0
    %v486 = vadd.f32 0.0, %v485
    %v487 = vpop.f32.mrb[0].mxu0
    %488 = vdwg.mxu0
    %489 = vmatprep.subr.bf16.mxu0 0
    %490 = vmatpush1.bf16.msra.mxu0 %v233
    %491 = vmatprep.subr.bf16.mxu0 0
    %492 = vmatpush1.bf16.msra.mxu0 %v234
    %493 = vmatprep.subr.bf16.mxu0 0
    %494 = vmatpush1.bf16.msra.mxu0 0
    %495 = vmatprep.subr.bf16.mxu0 0
    %496 = vmatpush1.bf16.msra.mxu0 0
    %497 = vmatprep.subr.bf16.mxu0 0
    %498 = vmatpush1.bf16.msra.mxu0 0
    %499 = vmatprep.subr.bf16.mxu0 0
    %500 = vmatpush1.bf16.msra.mxu0 0
    %501 = vmatprep.subr.bf16.mxu0 0
    %502 = vmatpush1.bf16.msra.mxu0 0
    %503 = vmatprep.subr.bf16.mxu0 0
    %504 = vmatpush1.bf16.msra.mxu0 0
    %505 = vmatprep.subr.bf16.mxu0 0
    %506 = vmatpush1.bf16.msra.mxu0 0
    %507 = vmatprep.subr.bf16.mxu0 0
    %508 = vmatpush1.bf16.msra.mxu0 0
    %509 = vmatprep.subr.bf16.mxu0 0
    %510 = vmatpush1.bf16.msra.mxu0 0
    %511 = vmatprep.subr.bf16.mxu0 0
    %512 = vmatpush1.bf16.msra.mxu0 0
    %513 = vmatprep.subr.bf16.mxu0 0
    %514 = vmatpush1.bf16.msra.mxu0 0
    %515 = vmatprep.subr.bf16.mxu0 0
    %516 = vmatpush1.bf16.msra.mxu0 0
    %517 = vmatprep.subr.bf16.mxu0 0
    %518 = vmatpush1.bf16.msra.mxu0 0
    %519 = vmatprep.subr.bf16.mxu0 0
    %520 = vmatpush1.bf16.msra.mxu0 0
    %521 = vmatprep.mubr.bf16.mxu0 0
    %522 = vmatmul.mubr.bf16.gmra.mrb[0].mxu0 %v244
    %v523 = vpop.f32.mrb[0].mxu0
    %v524 = vadd.f32 %v459, %v523
    %v525 = vpop.f32.mrb[0].mxu0
    %v526 = vpop.f32.mrb[0].mxu0
    %v527 = vadd.f32 %v462, %v526
    %v528 = vpop.f32.mrb[0].mxu0
    %529 = vmatprep.mubr.bf16.mxu0 0
    %530 = vmatmul.mubr.bf16.gmra.mrb[0].mxu0 %v247
    %v531 = vpop.f32.mrb[0].mxu0
    %v532 = vadd.f32 %v467, %v531
    %v533 = vpop.f32.mrb[0].mxu0
    %v534 = vpop.f32.mrb[0].mxu0
    %v535 = vadd.f32 %v470, %v534
    %v536 = vpop.f32.mrb[0].mxu0
    %537 = vmatprep.mubr.bf16.mxu0 0
    %538 = vmatmul.mubr.bf16.gmra.mrb[0].mxu0 %v250
    %v539 = vpop.f32.mrb[0].mxu0
    %v540 = vadd.f32 %v475, %v539
    %v541 = vpop.f32.mrb[0].mxu0
    %v542 = vpop.f32.mrb[0].mxu0
    %v543 = vadd.f32 %v478, %v542
    %v544 = vpop.f32.mrb[0].mxu0
    %545 = vmatprep.mubr.bf16.mxu0 0
    %546 = vmatmul.mubr.bf16.gmra.mrb[0].mxu0 %v253
    %v547 = vpop.f32.mrb[0].mxu0
    %v548 = vadd.f32 %v483, %v547
    %v549 = vpop.f32.mrb[0].mxu0
    %v550 = vpop.f32.mrb[0].mxu0
    %v551 = vadd.f32 %v486, %v550
    %v552 = vpop.f32.mrb[0].mxu0
    %553 = vdwg.mxu0
    %s554 = scalar_lea.vmem %s3, 64
    %v555 = vld [vmem:[%s554] sm:$0xff]
    %v556 = vld [vmem:[%s554 + $0x8] sm:$0xff]
    %v557 = vld [vmem:[%s554 + $0x10] sm:$0xff]
    %v558 = vld [vmem:[%s554 + $0x18] sm:$0xff]
    %v559 = vpack.c.bf16 %v556, %v555
    %v560 = vpack.c.bf16 %v558, %v557
    %561 = vmatprep.subr.bf16.mxu0 0
    %562 = vmatpush1.bf16.msra.mxu0 %v559
    %563 = vmatprep.subr.bf16.mxu0 0
    %564 = vmatpush1.bf16.msra.mxu0 %v560
    %565 = vmatprep.subr.bf16.mxu0 0
    %566 = vmatpush1.bf16.msra.mxu0 0
    %567 = vmatprep.subr.bf16.mxu0 0
    %568 = vmatpush1.bf16.msra.mxu0 0
    %569 = vmatprep.subr.bf16.mxu0 0
    %570 = vmatpush1.bf16.msra.mxu0 0
    %571 = vmatprep.subr.bf16.mxu0 0
    %572 = vmatpush1.bf16.msra.mxu0 0
    %573 = vmatprep.subr.bf16.mxu0 0
    %574 = vmatpush1.bf16.msra.mxu0 0
    %575 = vmatprep.subr.bf16.mxu0 0
    %576 = vmatpush1.bf16.msra.mxu0 0
    %577 = vmatprep.subr.bf16.mxu0 0
    %578 = vmatpush1.bf16.msra.mxu0 0
    %579 = vmatprep.subr.bf16.mxu0 0
    %580 = vmatpush1.bf16.msra.mxu0 0
    %581 = vmatprep.subr.bf16.mxu0 0
    %582 = vmatpush1.bf16.msra.mxu0 0
    %583 = vmatprep.subr.bf16.mxu0 0
    %584 = vmatpush1.bf16.msra.mxu0 0
    %585 = vmatprep.subr.bf16.mxu0 0
    %586 = vmatpush1.bf16.msra.mxu0 0
    %587 = vmatprep.subr.bf16.mxu0 0
    %588 = vmatpush1.bf16.msra.mxu0 0
    %589 = vmatprep.subr.bf16.mxu0 0
    %590 = vmatpush1.bf16.msra.mxu0 0
    %591 = vmatprep.subr.bf16.mxu0 0
    %592 = vmatpush1.bf16.msra.mxu0 0
    %593 = vmatprep.mubr.bf16.mxu0 0
    %594 = vmatmul.mubr.bf16.gmra.mrb[0].mxu0 %v413
    %v595 = vpop.f32.mrb[0].mxu0
    %v596 = vadd.f32 0.0, %v595
    %v597 = vpop.f32.mrb[0].mxu0
    %v598 = vpop.f32.mrb[0].mxu0
    %v599 = vadd.f32 0.0, %v598
    %v600 = vpop.f32.mrb[0].mxu0
    %601 = vmatprep.mubr.bf16.mxu0 0
    %602 = vmatmul.mubr.bf16.gmra.mrb[0].mxu0 %v416
    %v603 = vpop.f32.mrb[0].mxu0
    %v604 = vadd.f32 0.0, %v603
    %v605 = vpop.f32.mrb[0].mxu0
    %v606 = vpop.f32.mrb[0].mxu0
    %v607 = vadd.f32 0.0, %v606
    %v608 = vpop.f32.mrb[0].mxu0
    %609 = vmatprep.mubr.bf16.mxu0 0
    %610 = vmatmul.mubr.bf16.gmra.mrb[0].mxu0 %v419
    %v611 = vpop.f32.mrb[0].mxu0
    %v612 = vadd.f32 0.0, %v611
    %v613 = vpop.f32.mrb[0].mxu0
    %v614 = vpop.f32.mrb[0].mxu0
    %v615 = vadd.f32 0.0, %v614
    %v616 = vpop.f32.mrb[0].mxu0
    %617 = vmatprep.mubr.bf16.mxu0 0
    %618 = vmatmul.mubr.bf16.gmra.mrb[0].mxu0 %v422
    %v619 = vpop.f32.mrb[0].mxu0
    %v620 = vadd.f32 0.0, %v619
    %v621 = vpop.f32.mrb[0].mxu0
    %v622 = vpop.f32.mrb[0].mxu0
    %v623 = vadd.f32 0.0, %v622
    %v624 = vpop.f32.mrb[0].mxu0
    %625 = vdwg.mxu0
    %v626 = vpack.c.bf16 %v599, %v596
    %v627 = vpack.c.bf16 %v607, %v604
    %v628 = vpack.c.bf16 %v615, %v612
    %v629 = vpack.c.bf16 %v623, %v620
    %v630 = vld [vmem:[%s4 + $0x2] sm:$0x1]
    %v631 = vlaneseq
    %v632 = vshrl.u32 %v631, 7
    %v633 = vsub.s32 0, %v632
    %v634 = vrot.slane %v630, %v633
    %635 = vmatprep.subr.bf16.mxu0 0
    %636 = vmatpush1.bf16.msra.mxu0 %v626
    %637 = vmatprep.subr.bf16.mxu0 0
    %638 = vmatpush1.bf16.msra.mxu0 %v627
    %639 = vmatprep.subr.bf16.mxu0 0
    %640 = vmatpush1.bf16.msra.mxu0 %v628
    %641 = vmatprep.subr.bf16.mxu0 0
    %642 = vmatpush1.bf16.msra.mxu0 %v629
    %643 = vmatprep.subr.bf16.mxu0 0
    %644 = vmatpush1.bf16.msra.mxu0 0
    %645 = vmatprep.subr.bf16.mxu0 0
    %646 = vmatpush1.bf16.msra.mxu0 0
    %647 = vmatprep.subr.bf16.mxu0 0
    %648 = vmatpush1.bf16.msra.mxu0 0
    %649 = vmatprep.subr.bf16.mxu0 0
    %650 = vmatpush1.bf16.msra.mxu0 0
    %651 = vmatprep.subr.bf16.mxu0 0
    %652 = vmatpush1.bf16.msra.mxu0 0
    %653 = vmatprep.subr.bf16.mxu0 0
    %654 = vmatpush1.bf16.msra.mxu0 0
    %655 = vmatprep.subr.bf16.mxu0 0
    %656 = vmatpush1.bf16.msra.mxu0 0
    %657 = vmatprep.subr.bf16.mxu0 0
    %658 = vmatpush1.bf16.msra.mxu0 0
    %659 = vmatprep.subr.bf16.mxu0 0
    %660 = vmatpush1.bf16.msra.mxu0 0
    %661 = vmatprep.subr.bf16.mxu0 0
    %662 = vmatpush1.bf16.msra.mxu0 0
    %663 = vmatprep.subr.bf16.mxu0 0
    %664 = vmatpush1.bf16.msra.mxu0 0
    %665 = vmatprep.subr.bf16.mxu0 0
    %666 = vmatpush1.bf16.msra.mxu0 0
    %667 = vmatprep.mubr.bf16.mxu0 0
    %668 = vmatmul.mubr.bf16.gmra.mrb[0].mxu0 %v51
    %v669 = vpop.f32.mrb[0].mxu0
    %v670 = vadd.f32 %v634, %v669
    %v671 = vpop.f32.mrb[0].mxu0
    %v672 = vpop.f32.mrb[0].mxu0
    %v673 = vadd.f32 %v634, %v672
    %v674 = vpop.f32.mrb[0].mxu0
    %675 = vmatprep.mubr.bf16.mxu0 0
    %676 = vmatmul.mubr.bf16.gmra.mrb[0].mxu0 %v54
    %v677 = vpop.f32.mrb[0].mxu0
    %v678 = vadd.f32 %v634, %v677
    %v679 = vpop.f32.mrb[0].mxu0
    %v680 = vpop.f32.mrb[0].mxu0
    %v681 = vadd.f32 %v634, %v680
    %v682 = vpop.f32.mrb[0].mxu0
    %683 = vmatprep.mubr.bf16.mxu0 0
    %684 = vmatmul.mubr.bf16.gmra.mrb[0].mxu0 %v57
    %v685 = vpop.f32.mrb[0].mxu0
    %v686 = vadd.f32 %v634, %v685
    %v687 = vpop.f32.mrb[0].mxu0
    %v688 = vpop.f32.mrb[0].mxu0
    %v689 = vadd.f32 %v634, %v688
    %v690 = vpop.f32.mrb[0].mxu0
    %691 = vmatprep.mubr.bf16.mxu0 0
    %692 = vmatmul.mubr.bf16.gmra.mrb[0].mxu0 %v60
    %v693 = vpop.f32.mrb[0].mxu0
    %v694 = vadd.f32 %v634, %v693
    %v695 = vpop.f32.mrb[0].mxu0
    %v696 = vpop.f32.mrb[0].mxu0
    %v697 = vadd.f32 %v634, %v696
    %v698 = vpop.f32.mrb[0].mxu0
    %699 = vdwg.mxu0
    %v700 = vmax.f32 %v670, 0.0
    %v701 = vmax.f32 %v673, 0.0
    %v702 = vmax.f32 %v678, 0.0
    %v703 = vmax.f32 %v681, 0.0
    %v704 = vmax.f32 %v686, 0.0
    %v705 = vmax.f32 %v689, 0.0
    %v706 = vmax.f32 %v694, 0.0
    %v707 = vmax.f32 %v697, 0.0
    %v708 = vpack.c.bf16 %v701, %v700
    %v709 = vpack.c.bf16 %v703, %v702
    %v710 = vpack.c.bf16 %v705, %v704
    %v711 = vpack.c.bf16 %v707, %v706
    %v712 = vld [vmem:[%s5 + $0x40] sm:$0xff]
    %v713 = vld [vmem:[%s5 + $0x48] sm:$0xff]
    %v714 = vld [vmem:[%s5 + $0x50] sm:$0xff]
    %v715 = vld [vmem:[%s5 + $0x58] sm:$0xff]
    %v716 = vpack.c.bf16 %v713, %v712
    %v717 = vpack.c.bf16 %v715, %v714
    %v719 = vsel %vm242, %v708, 0
    %v722 = vsel %vm242, %v709, 0
    %v725 = vsel %vm242, %v710, 0
    %v728 = vsel %vm242, %v711, 0
    %730 = vmatprep.subr.bf16.mxu0 0
    %731 = vmatpush1.bf16.msra.mxu0 %v716
    %732 = vmatprep.subr.bf16.mxu0 0
    %733 = vmatpush1.bf16.msra.mxu0 %v717
    %734 = vmatprep.subr.bf16.mxu0 0
    %735 = vmatpush1.bf16.msra.mxu0 0
    %736 = vmatprep.subr.bf16.mxu0 0
    %737 = vmatpush1.bf16.msra.mxu0 0
    %738 = vmatprep.subr.bf16.mxu0 0
    %739 = vmatpush1.bf16.msra.mxu0 0
    %740 = vmatprep.subr.bf16.mxu0 0
    %741 = vmatpush1.bf16.msra.mxu0 0
    %742 = vmatprep.subr.bf16.mxu0 0
    %743 = vmatpush1.bf16.msra.mxu0 0
    %744 = vmatprep.subr.bf16.mxu0 0
    %745 = vmatpush1.bf16.msra.mxu0 0
    %746 = vmatprep.subr.bf16.mxu0 0
    %747 = vmatpush1.bf16.msra.mxu0 0
    %748 = vmatprep.subr.bf16.mxu0 0
    %749 = vmatpush1.bf16.msra.mxu0 0
    %750 = vmatprep.subr.bf16.mxu0 0
    %751 = vmatpush1.bf16.msra.mxu0 0
    %752 = vmatprep.subr.bf16.mxu0 0
    %753 = vmatpush1.bf16.msra.mxu0 0
    %754 = vmatprep.subr.bf16.mxu0 0
    %755 = vmatpush1.bf16.msra.mxu0 0
    %756 = vmatprep.subr.bf16.mxu0 0
    %757 = vmatpush1.bf16.msra.mxu0 0
    %758 = vmatprep.subr.bf16.mxu0 0
    %759 = vmatpush1.bf16.msra.mxu0 0
    %760 = vmatprep.subr.bf16.mxu0 0
    %761 = vmatpush1.bf16.msra.mxu0 0
    %762 = vmatprep.mubr.bf16.mxu0 0
    %763 = vmatmul.mubr.bf16.gmra.mrb[0].mxu0 %v719
    %v764 = vpop.f32.mrb[0].mxu0
    %v765 = vadd.f32 0.0, %v764
    %v766 = vpop.f32.mrb[0].mxu0
    %v767 = vpop.f32.mrb[0].mxu0
    %v768 = vadd.f32 0.0, %v767
    %v769 = vpop.f32.mrb[0].mxu0
    %770 = vmatprep.mubr.bf16.mxu0 0
    %771 = vmatmul.mubr.bf16.gmra.mrb[0].mxu0 %v722
    %v772 = vpop.f32.mrb[0].mxu0
    %v773 = vadd.f32 0.0, %v772
    %v774 = vpop.f32.mrb[0].mxu0
    %v775 = vpop.f32.mrb[0].mxu0
    %v776 = vadd.f32 0.0, %v775
    %v777 = vpop.f32.mrb[0].mxu0
    %778 = vmatprep.mubr.bf16.mxu0 0
    %779 = vmatmul.mubr.bf16.gmra.mrb[0].mxu0 %v725
    %v780 = vpop.f32.mrb[0].mxu0
    %v781 = vadd.f32 0.0, %v780
    %v782 = vpop.f32.mrb[0].mxu0
    %v783 = vpop.f32.mrb[0].mxu0
    %v784 = vadd.f32 0.0, %v783
    %v785 = vpop.f32.mrb[0].mxu0
    %786 = vmatprep.mubr.bf16.mxu0 0
    %787 = vmatmul.mubr.bf16.gmra.mrb[0].mxu0 %v728
    %v788 = vpop.f32.mrb[0].mxu0
    %v789 = vadd.f32 0.0, %v788
    %v790 = vpop.f32.mrb[0].mxu0
    %v791 = vpop.f32.mrb[0].mxu0
    %v792 = vadd.f32 0.0, %v791
    %v793 = vpop.f32.mrb[0].mxu0
    %794 = vdwg.mxu0
    %v795 = vadd.f32 %v524, %v765
    %v796 = vadd.f32 %v527, %v768
    %v797 = vadd.f32 %v532, %v773
    %v798 = vadd.f32 %v535, %v776
    %v799 = vadd.f32 %v540, %v781
    %v800 = vadd.f32 %v543, %v784
    %v801 = vadd.f32 %v548, %v789
    %v802 = vadd.f32 %v551, %v792
    %s803 = scalar_lea.vmem %s3, 96
    %v804 = vld [vmem:[%s803] sm:$0xff]
    %v805 = vld [vmem:[%s803 + $0x8] sm:$0xff]
    %v806 = vld [vmem:[%s803 + $0x10] sm:$0xff]
    %v807 = vld [vmem:[%s803 + $0x18] sm:$0xff]
    %v808 = vpack.c.bf16 %v805, %v804
    %v809 = vpack.c.bf16 %v807, %v806
    %810 = vmatprep.subr.bf16.mxu0 0
    %811 = vmatpush1.bf16.msra.mxu0 %v808
    %812 = vmatprep.subr.bf16.mxu0 0
    %813 = vmatpush1.bf16.msra.mxu0 %v809
    %814 = vmatprep.subr.bf16.mxu0 0
    %815 = vmatpush1.bf16.msra.mxu0 0
    %816 = vmatprep.subr.bf16.mxu0 0
    %817 = vmatpush1.bf16.msra.mxu0 0
    %818 = vmatprep.subr.bf16.mxu0 0
    %819 = vmatpush1.bf16.msra.mxu0 0
    %820 = vmatprep.subr.bf16.mxu0 0
    %821 = vmatpush1.bf16.msra.mxu0 0
    %822 = vmatprep.subr.bf16.mxu0 0
    %823 = vmatpush1.bf16.msra.mxu0 0
    %824 = vmatprep.subr.bf16.mxu0 0
    %825 = vmatpush1.bf16.msra.mxu0 0
    %826 = vmatprep.subr.bf16.mxu0 0
    %827 = vmatpush1.bf16.msra.mxu0 0
    %828 = vmatprep.subr.bf16.mxu0 0
    %829 = vmatpush1.bf16.msra.mxu0 0
    %830 = vmatprep.subr.bf16.mxu0 0
    %831 = vmatpush1.bf16.msra.mxu0 0
    %832 = vmatprep.subr.bf16.mxu0 0
    %833 = vmatpush1.bf16.msra.mxu0 0
    %834 = vmatprep.subr.bf16.mxu0 0
    %835 = vmatpush1.bf16.msra.mxu0 0
    %836 = vmatprep.subr.bf16.mxu0 0
    %837 = vmatpush1.bf16.msra.mxu0 0
    %838 = vmatprep.subr.bf16.mxu0 0
    %839 = vmatpush1.bf16.msra.mxu0 0
    %840 = vmatprep.subr.bf16.mxu0 0
    %841 = vmatpush1.bf16.msra.mxu0 0
    %842 = vmatprep.mubr.bf16.mxu0 0
    %843 = vmatmul.mubr.bf16.gmra.mrb[0].mxu0 %v719
    %v844 = vpop.f32.mrb[0].mxu0
    %v845 = vadd.f32 0.0, %v844
    %v846 = vpop.f32.mrb[0].mxu0
    %v847 = vpop.f32.mrb[0].mxu0
    %v848 = vadd.f32 0.0, %v847
    %v849 = vpop.f32.mrb[0].mxu0
    %850 = vmatprep.mubr.bf16.mxu0 0
    %851 = vmatmul.mubr.bf16.gmra.mrb[0].mxu0 %v722
    %v852 = vpop.f32.mrb[0].mxu0
    %v853 = vadd.f32 0.0, %v852
    %v854 = vpop.f32.mrb[0].mxu0
    %v855 = vpop.f32.mrb[0].mxu0
    %v856 = vadd.f32 0.0, %v855
    %v857 = vpop.f32.mrb[0].mxu0
    %858 = vmatprep.mubr.bf16.mxu0 0
    %859 = vmatmul.mubr.bf16.gmra.mrb[0].mxu0 %v725
    %v860 = vpop.f32.mrb[0].mxu0
    %v861 = vadd.f32 0.0, %v860
    %v862 = vpop.f32.mrb[0].mxu0
    %v863 = vpop.f32.mrb[0].mxu0
    %v864 = vadd.f32 0.0, %v863
    %v865 = vpop.f32.mrb[0].mxu0
    %866 = vmatprep.mubr.bf16.mxu0 0
    %867 = vmatmul.mubr.bf16.gmra.mrb[0].mxu0 %v728
    %v868 = vpop.f32.mrb[0].mxu0
    %v869 = vadd.f32 0.0, %v868
    %v870 = vpop.f32.mrb[0].mxu0
    %v871 = vpop.f32.mrb[0].mxu0
    %v872 = vadd.f32 0.0, %v871
    %v873 = vpop.f32.mrb[0].mxu0
    %874 = vdwg.mxu0
    %v875 = vpack.c.bf16 %v848, %v845
    %v876 = vpack.c.bf16 %v856, %v853
    %v877 = vpack.c.bf16 %v864, %v861
    %v878 = vpack.c.bf16 %v872, %v869
    %v879 = vld [vmem:[%s4 + $0x3] sm:$0x1]
    %v880 = vlaneseq
    %v881 = vshrl.u32 %v880, 7
    %v882 = vsub.s32 0, %v881
    %v883 = vrot.slane %v879, %v882
    %884 = vmatprep.subr.bf16.mxu0 0
    %885 = vmatpush1.bf16.msra.mxu0 %v875
    %886 = vmatprep.subr.bf16.mxu0 0
    %887 = vmatpush1.bf16.msra.mxu0 %v876
    %888 = vmatprep.subr.bf16.mxu0 0
    %889 = vmatpush1.bf16.msra.mxu0 %v877
    %890 = vmatprep.subr.bf16.mxu0 0
    %891 = vmatpush1.bf16.msra.mxu0 %v878
    %892 = vmatprep.subr.bf16.mxu0 0
    %893 = vmatpush1.bf16.msra.mxu0 0
    %894 = vmatprep.subr.bf16.mxu0 0
    %895 = vmatpush1.bf16.msra.mxu0 0
    %896 = vmatprep.subr.bf16.mxu0 0
    %897 = vmatpush1.bf16.msra.mxu0 0
    %898 = vmatprep.subr.bf16.mxu0 0
    %899 = vmatpush1.bf16.msra.mxu0 0
    %900 = vmatprep.subr.bf16.mxu0 0
    %901 = vmatpush1.bf16.msra.mxu0 0
    %902 = vmatprep.subr.bf16.mxu0 0
    %903 = vmatpush1.bf16.msra.mxu0 0
    %904 = vmatprep.subr.bf16.mxu0 0
    %905 = vmatpush1.bf16.msra.mxu0 0
    %906 = vmatprep.subr.bf16.mxu0 0
    %907 = vmatpush1.bf16.msra.mxu0 0
    %908 = vmatprep.subr.bf16.mxu0 0
    %909 = vmatpush1.bf16.msra.mxu0 0
    %910 = vmatprep.subr.bf16.mxu0 0
    %911 = vmatpush1.bf16.msra.mxu0 0
    %912 = vmatprep.subr.bf16.mxu0 0
    %913 = vmatpush1.bf16.msra.mxu0 0
    %914 = vmatprep.subr.bf16.mxu0 0
    %915 = vmatpush1.bf16.msra.mxu0 0
    %916 = vmatprep.mubr.bf16.mxu0 0
    %917 = vmatmul.mubr.bf16.gmra.mrb[0].mxu0 %v51
    %v918 = vpop.f32.mrb[0].mxu0
    %v919 = vadd.f32 %v883, %v918
    %v920 = vpop.f32.mrb[0].mxu0
    %v921 = vpop.f32.mrb[0].mxu0
    %v922 = vadd.f32 %v883, %v921
    %v923 = vpop.f32.mrb[0].mxu0
    %924 = vmatprep.mubr.bf16.mxu0 0
    %925 = vmatmul.mubr.bf16.gmra.mrb[0].mxu0 %v54
    %v926 = vpop.f32.mrb[0].mxu0
    %v927 = vadd.f32 %v883, %v926
    %v928 = vpop.f32.mrb[0].mxu0
    %v929 = vpop.f32.mrb[0].mxu0
    %v930 = vadd.f32 %v883, %v929
    %v931 = vpop.f32.mrb[0].mxu0
    %932 = vmatprep.mubr.bf16.mxu0 0
    %933 = vmatmul.mubr.bf16.gmra.mrb[0].mxu0 %v57
    %v934 = vpop.f32.mrb[0].mxu0
    %v935 = vadd.f32 %v883, %v934
    %v936 = vpop.f32.mrb[0].mxu0
    %v937 = vpop.f32.mrb[0].mxu0
    %v938 = vadd.f32 %v883, %v937
    %v939 = vpop.f32.mrb[0].mxu0
    %940 = vmatprep.mubr.bf16.mxu0 0
    %941 = vmatmul.mubr.bf16.gmra.mrb[0].mxu0 %v60
    %v942 = vpop.f32.mrb[0].mxu0
    %v943 = vadd.f32 %v883, %v942
    %v944 = vpop.f32.mrb[0].mxu0
    %v945 = vpop.f32.mrb[0].mxu0
    %v946 = vadd.f32 %v883, %v945
    %v947 = vpop.f32.mrb[0].mxu0
    %948 = vdwg.mxu0
    %v949 = vmax.f32 %v919, 0.0
    %v950 = vmax.f32 %v922, 0.0
    %v951 = vmax.f32 %v927, 0.0
    %v952 = vmax.f32 %v930, 0.0
    %v953 = vmax.f32 %v935, 0.0
    %v954 = vmax.f32 %v938, 0.0
    %v955 = vmax.f32 %v943, 0.0
    %v956 = vmax.f32 %v946, 0.0
    %v957 = vpack.c.bf16 %v950, %v949
    %v958 = vpack.c.bf16 %v952, %v951
    %v959 = vpack.c.bf16 %v954, %v953
    %v960 = vpack.c.bf16 %v956, %v955
    %v961 = vld [vmem:[%s5 + $0x60] sm:$0xff]
    %v962 = vld [vmem:[%s5 + $0x68] sm:$0xff]
    %v963 = vld [vmem:[%s5 + $0x70] sm:$0xff]
    %v964 = vld [vmem:[%s5 + $0x78] sm:$0xff]
    %v965 = vpack.c.bf16 %v962, %v961
    %v966 = vpack.c.bf16 %v964, %v963
    %v968 = vsel %vm242, %v957, 0
    %v971 = vsel %vm242, %v958, 0
    %v974 = vsel %vm242, %v959, 0
    %v977 = vsel %vm242, %v960, 0
    %979 = vmatprep.subr.bf16.mxu0 0
    %980 = vmatpush1.bf16.msra.mxu0 %v965
    %981 = vmatprep.subr.bf16.mxu0 0
    %982 = vmatpush1.bf16.msra.mxu0 %v966
    %983 = vmatprep.subr.bf16.mxu0 0
    %984 = vmatpush1.bf16.msra.mxu0 0
    %985 = vmatprep.subr.bf16.mxu0 0
    %986 = vmatpush1.bf16.msra.mxu0 0
    %987 = vmatprep.subr.bf16.mxu0 0
    %988 = vmatpush1.bf16.msra.mxu0 0
    %989 = vmatprep.subr.bf16.mxu0 0
    %990 = vmatpush1.bf16.msra.mxu0 0
    %991 = vmatprep.subr.bf16.mxu0 0
    %992 = vmatpush1.bf16.msra.mxu0 0
    %993 = vmatprep.subr.bf16.mxu0 0
    %994 = vmatpush1.bf16.msra.mxu0 0
    %995 = vmatprep.subr.bf16.mxu0 0
    %996 = vmatpush1.bf16.msra.mxu0 0
    %997 = vmatprep.subr.bf16.mxu0 0
    %998 = vmatpush1.bf16.msra.mxu0 0
    %999 = vmatprep.subr.bf16.mxu0 0
    %1000 = vmatpush1.bf16.msra.mxu0 0
    %1001 = vmatprep.subr.bf16.mxu0 0
    %1002 = vmatpush1.bf16.msra.mxu0 0
    %1003 = vmatprep.subr.bf16.mxu0 0
    %1004 = vmatpush1.bf16.msra.mxu0 0
    %1005 = vmatprep.subr.bf16.mxu0 0
    %1006 = vmatpush1.bf16.msra.mxu0 0
    %1007 = vmatprep.subr.bf16.mxu0 0
    %1008 = vmatpush1.bf16.msra.mxu0 0
    %1009 = vmatprep.subr.bf16.mxu0 0
    %1010 = vmatpush1.bf16.msra.mxu0 0
    %1011 = vmatprep.mubr.bf16.mxu0 0
    %1012 = vmatmul.mubr.bf16.gmra.mrb[0].mxu0 %v968
    %v1013 = vpop.f32.mrb[0].mxu0
    %v1014 = vadd.f32 0.0, %v1013
    %v1015 = vpop.f32.mrb[0].mxu0
    %v1016 = vpop.f32.mrb[0].mxu0
    %v1017 = vadd.f32 0.0, %v1016
    %v1018 = vpop.f32.mrb[0].mxu0
    %1019 = vmatprep.mubr.bf16.mxu0 0
    %1020 = vmatmul.mubr.bf16.gmra.mrb[0].mxu0 %v971
    %v1021 = vpop.f32.mrb[0].mxu0
    %v1022 = vadd.f32 0.0, %v1021
    %v1023 = vpop.f32.mrb[0].mxu0
    %v1024 = vpop.f32.mrb[0].mxu0
    %v1025 = vadd.f32 0.0, %v1024
    %v1026 = vpop.f32.mrb[0].mxu0
    %1027 = vmatprep.mubr.bf16.mxu0 0
    %1028 = vmatmul.mubr.bf16.gmra.mrb[0].mxu0 %v974
    %v1029 = vpop.f32.mrb[0].mxu0
    %v1030 = vadd.f32 0.0, %v1029
    %v1031 = vpop.f32.mrb[0].mxu0
    %v1032 = vpop.f32.mrb[0].mxu0
    %v1033 = vadd.f32 0.0, %v1032
    %v1034 = vpop.f32.mrb[0].mxu0
    %1035 = vmatprep.mubr.bf16.mxu0 0
    %1036 = vmatmul.mubr.bf16.gmra.mrb[0].mxu0 %v977
    %v1037 = vpop.f32.mrb[0].mxu0
    %v1038 = vadd.f32 0.0, %v1037
    %v1039 = vpop.f32.mrb[0].mxu0
    %v1040 = vpop.f32.mrb[0].mxu0
    %v1041 = vadd.f32 0.0, %v1040
    %v1042 = vpop.f32.mrb[0].mxu0
    %1043 = vdwg.mxu0
    %v1044 = vadd.f32 %v795, %v1014
    %v1045 = vadd.f32 %v796, %v1017
    %v1046 = vadd.f32 %v797, %v1022
    %v1047 = vadd.f32 %v798, %v1025
    %v1048 = vadd.f32 %v799, %v1030
    %v1049 = vadd.f32 %v800, %v1033
    %v1050 = vadd.f32 %v801, %v1038
    %v1051 = vadd.f32 %v802, %v1041
    %s1052 = scalar_lea.vmem %s3, 128
    %v1053 = vld [vmem:[%s1052] sm:$0xff]
    %v1054 = vld [vmem:[%s1052 + $0x8] sm:$0xff]
    %v1055 = vld [vmem:[%s1052 + $0x10] sm:$0xff]
    %v1056 = vld [vmem:[%s1052 + $0x18] sm:$0xff]
    %v1057 = vpack.c.bf16 %v1054, %v1053
    %v1058 = vpack.c.bf16 %v1056, %v1055
    %1059 = vmatprep.subr.bf16.mxu0 0
    %1060 = vmatpush1.bf16.msra.mxu0 %v1057
    %1061 = vmatprep.subr.bf16.mxu0 0
    %1062 = vmatpush1.bf16.msra.mxu0 %v1058
    %1063 = vmatprep.subr.bf16.mxu0 0
    %1064 = vmatpush1.bf16.msra.mxu0 0
    %1065 = vmatprep.subr.bf16.mxu0 0
    %1066 = vmatpush1.bf16.msra.mxu0 0
    %1067 = vmatprep.subr.bf16.mxu0 0
    %1068 = vmatpush1.bf16.msra.mxu0 0
    %1069 = vmatprep.subr.bf16.mxu0 0
    %1070 = vmatpush1.bf16.msra.mxu0 0
    %1071 = vmatprep.subr.bf16.mxu0 0
    %1072 = vmatpush1.bf16.msra.mxu0 0
    %1073 = vmatprep.subr.bf16.mxu0 0
    %1074 = vmatpush1.bf16.msra.mxu0 0
    %1075 = vmatprep.subr.bf16.mxu0 0
    %1076 = vmatpush1.bf16.msra.mxu0 0
    %1077 = vmatprep.subr.bf16.mxu0 0
    %1078 = vmatpush1.bf16.msra.mxu0 0
    %1079 = vmatprep.subr.bf16.mxu0 0
    %1080 = vmatpush1.bf16.msra.mxu0 0
    %1081 = vmatprep.subr.bf16.mxu0 0
    %1082 = vmatpush1.bf16.msra.mxu0 0
    %1083 = vmatprep.subr.bf16.mxu0 0
    %1084 = vmatpush1.bf16.msra.mxu0 0
    %1085 = vmatprep.subr.bf16.mxu0 0
    %1086 = vmatpush1.bf16.msra.mxu0 0
    %1087 = vmatprep.subr.bf16.mxu0 0
    %1088 = vmatpush1.bf16.msra.mxu0 0
    %1089 = vmatprep.subr.bf16.mxu0 0
    %1090 = vmatpush1.bf16.msra.mxu0 0
    %1091 = vmatprep.mubr.bf16.mxu0 0
    %1092 = vmatmul.mubr.bf16.gmra.mrb[0].mxu0 %v968
    %v1093 = vpop.f32.mrb[0].mxu0
    %v1094 = vadd.f32 0.0, %v1093
    %v1095 = vpop.f32.mrb[0].mxu0
    %v1096 = vpop.f32.mrb[0].mxu0
    %v1097 = vadd.f32 0.0, %v1096
    %v1098 = vpop.f32.mrb[0].mxu0
    %1099 = vmatprep.mubr.bf16.mxu0 0
    %1100 = vmatmul.mubr.bf16.gmra.mrb[0].mxu0 %v971
    %v1101 = vpop.f32.mrb[0].mxu0
    %v1102 = vadd.f32 0.0, %v1101
    %v1103 = vpop.f32.mrb[0].mxu0
    %v1104 = vpop.f32.mrb[0].mxu0
    %v1105 = vadd.f32 0.0, %v1104
    %v1106 = vpop.f32.mrb[0].mxu0
    %1107 = vmatprep.mubr.bf16.mxu0 0
    %1108 = vmatmul.mubr.bf16.gmra.mrb[0].mxu0 %v974
    %v1109 = vpop.f32.mrb[0].mxu0
    %v1110 = vadd.f32 0.0, %v1109
    %v1111 = vpop.f32.mrb[0].mxu0
    %v1112 = vpop.f32.mrb[0].mxu0
    %v1113 = vadd.f32 0.0, %v1112
    %v1114 = vpop.f32.mrb[0].mxu0
    %1115 = vmatprep.mubr.bf16.mxu0 0
    %1116 = vmatmul.mubr.bf16.gmra.mrb[0].mxu0 %v977
    %v1117 = vpop.f32.mrb[0].mxu0
    %v1118 = vadd.f32 0.0, %v1117
    %v1119 = vpop.f32.mrb[0].mxu0
    %v1120 = vpop.f32.mrb[0].mxu0
    %v1121 = vadd.f32 0.0, %v1120
    %v1122 = vpop.f32.mrb[0].mxu0
    %1123 = vdwg.mxu0
    %v1124 = vpack.c.bf16 %v1097, %v1094
    %v1125 = vpack.c.bf16 %v1105, %v1102
    %v1126 = vpack.c.bf16 %v1113, %v1110
    %v1127 = vpack.c.bf16 %v1121, %v1118
    %v1128 = vld [vmem:[%s4 + $0x4] sm:$0x1]
    %v1129 = vlaneseq
    %v1130 = vshrl.u32 %v1129, 7
    %v1131 = vsub.s32 0, %v1130
    %v1132 = vrot.slane %v1128, %v1131
    %1133 = vmatprep.subr.bf16.mxu0 0
    %1134 = vmatpush1.bf16.msra.mxu0 %v1124
    %1135 = vmatprep.subr.bf16.mxu0 0
    %1136 = vmatpush1.bf16.msra.mxu0 %v1125
    %1137 = vmatprep.subr.bf16.mxu0 0
    %1138 = vmatpush1.bf16.msra.mxu0 %v1126
    %1139 = vmatprep.subr.bf16.mxu0 0
    %1140 = vmatpush1.bf16.msra.mxu0 %v1127
    %1141 = vmatprep.subr.bf16.mxu0 0
    %1142 = vmatpush1.bf16.msra.mxu0 0
    %1143 = vmatprep.subr.bf16.mxu0 0
    %1144 = vmatpush1.bf16.msra.mxu0 0
    %1145 = vmatprep.subr.bf16.mxu0 0
    %1146 = vmatpush1.bf16.msra.mxu0 0
    %1147 = vmatprep.subr.bf16.mxu0 0
    %1148 = vmatpush1.bf16.msra.mxu0 0
    %1149 = vmatprep.subr.bf16.mxu0 0
    %1150 = vmatpush1.bf16.msra.mxu0 0
    %1151 = vmatprep.subr.bf16.mxu0 0
    %1152 = vmatpush1.bf16.msra.mxu0 0
    %1153 = vmatprep.subr.bf16.mxu0 0
    %1154 = vmatpush1.bf16.msra.mxu0 0
    %1155 = vmatprep.subr.bf16.mxu0 0
    %1156 = vmatpush1.bf16.msra.mxu0 0
    %1157 = vmatprep.subr.bf16.mxu0 0
    %1158 = vmatpush1.bf16.msra.mxu0 0
    %1159 = vmatprep.subr.bf16.mxu0 0
    %1160 = vmatpush1.bf16.msra.mxu0 0
    %1161 = vmatprep.subr.bf16.mxu0 0
    %1162 = vmatpush1.bf16.msra.mxu0 0
    %1163 = vmatprep.subr.bf16.mxu0 0
    %1164 = vmatpush1.bf16.msra.mxu0 0
    %1165 = vmatprep.mubr.bf16.mxu0 0
    %1166 = vmatmul.mubr.bf16.gmra.mrb[0].mxu0 %v51
    %v1167 = vpop.f32.mrb[0].mxu0
    %v1168 = vadd.f32 %v1132, %v1167
    %v1169 = vpop.f32.mrb[0].mxu0
    %v1170 = vpop.f32.mrb[0].mxu0
    %v1171 = vadd.f32 %v1132, %v1170
    %v1172 = vpop.f32.mrb[0].mxu0
    %1173 = vmatprep.mubr.bf16.mxu0 0
    %1174 = vmatmul.mubr.bf16.gmra.mrb[0].mxu0 %v54
    %v1175 = vpop.f32.mrb[0].mxu0
    %v1176 = vadd.f32 %v1132, %v1175
    %v1177 = vpop.f32.mrb[0].mxu0
    %v1178 = vpop.f32.mrb[0].mxu0
    %v1179 = vadd.f32 %v1132, %v1178
    %v1180 = vpop.f32.mrb[0].mxu0
    %1181 = vmatprep.mubr.bf16.mxu0 0
    %1182 = vmatmul.mubr.bf16.gmra.mrb[0].mxu0 %v57
    %v1183 = vpop.f32.mrb[0].mxu0
    %v1184 = vadd.f32 %v1132, %v1183
    %v1185 = vpop.f32.mrb[0].mxu0
    %v1186 = vpop.f32.mrb[0].mxu0
    %v1187 = vadd.f32 %v1132, %v1186
    %v1188 = vpop.f32.mrb[0].mxu0
    %1189 = vmatprep.mubr.bf16.mxu0 0
    %1190 = vmatmul.mubr.bf16.gmra.mrb[0].mxu0 %v60
    %v1191 = vpop.f32.mrb[0].mxu0
    %v1192 = vadd.f32 %v1132, %v1191
    %v1193 = vpop.f32.mrb[0].mxu0
    %v1194 = vpop.f32.mrb[0].mxu0
    %v1195 = vadd.f32 %v1132, %v1194
    %v1196 = vpop.f32.mrb[0].mxu0
    %1197 = vdwg.mxu0
    %v1198 = vmax.f32 %v1168, 0.0
    %v1199 = vmax.f32 %v1171, 0.0
    %v1200 = vmax.f32 %v1176, 0.0
    %v1201 = vmax.f32 %v1179, 0.0
    %v1202 = vmax.f32 %v1184, 0.0
    %v1203 = vmax.f32 %v1187, 0.0
    %v1204 = vmax.f32 %v1192, 0.0
    %v1205 = vmax.f32 %v1195, 0.0
    %v1206 = vpack.c.bf16 %v1199, %v1198
    %v1207 = vpack.c.bf16 %v1201, %v1200
    %v1208 = vpack.c.bf16 %v1203, %v1202
    %v1209 = vpack.c.bf16 %v1205, %v1204
    %v1210 = vld [vmem:[%s5 + $0x80] sm:$0xff]
    %v1211 = vld [vmem:[%s5 + $0x88] sm:$0xff]
    %v1212 = vld [vmem:[%s5 + $0x90] sm:$0xff]
    %v1213 = vld [vmem:[%s5 + $0x98] sm:$0xff]
    %v1214 = vpack.c.bf16 %v1211, %v1210
    %v1215 = vpack.c.bf16 %v1213, %v1212
    %v1217 = vsel %vm242, %v1206, 0
    %v1220 = vsel %vm242, %v1207, 0
    %v1223 = vsel %vm242, %v1208, 0
    %v1226 = vsel %vm242, %v1209, 0
    %1228 = vmatprep.subr.bf16.mxu0 0
    %1229 = vmatpush1.bf16.msra.mxu0 %v1214
    %1230 = vmatprep.subr.bf16.mxu0 0
    %1231 = vmatpush1.bf16.msra.mxu0 %v1215
    %1232 = vmatprep.subr.bf16.mxu0 0
    %1233 = vmatpush1.bf16.msra.mxu0 0
    %1234 = vmatprep.subr.bf16.mxu0 0
    %1235 = vmatpush1.bf16.msra.mxu0 0
    %1236 = vmatprep.subr.bf16.mxu0 0
    %1237 = vmatpush1.bf16.msra.mxu0 0
    %1238 = vmatprep.subr.bf16.mxu0 0
    %1239 = vmatpush1.bf16.msra.mxu0 0
    %1240 = vmatprep.subr.bf16.mxu0 0
    %1241 = vmatpush1.bf16.msra.mxu0 0
    %1242 = vmatprep.subr.bf16.mxu0 0
    %1243 = vmatpush1.bf16.msra.mxu0 0
    %1244 = vmatprep.subr.bf16.mxu0 0
    %1245 = vmatpush1.bf16.msra.mxu0 0
    %1246 = vmatprep.subr.bf16.mxu0 0
    %1247 = vmatpush1.bf16.msra.mxu0 0
    %1248 = vmatprep.subr.bf16.mxu0 0
    %1249 = vmatpush1.bf16.msra.mxu0 0
    %1250 = vmatprep.subr.bf16.mxu0 0
    %1251 = vmatpush1.bf16.msra.mxu0 0
    %1252 = vmatprep.subr.bf16.mxu0 0
    %1253 = vmatpush1.bf16.msra.mxu0 0
    %1254 = vmatprep.subr.bf16.mxu0 0
    %1255 = vmatpush1.bf16.msra.mxu0 0
    %1256 = vmatprep.subr.bf16.mxu0 0
    %1257 = vmatpush1.bf16.msra.mxu0 0
    %1258 = vmatprep.subr.bf16.mxu0 0
    %1259 = vmatpush1.bf16.msra.mxu0 0
    %1260 = vmatprep.mubr.bf16.mxu0 0
    %1261 = vmatmul.mubr.bf16.gmra.mrb[0].mxu0 %v1217
    %v1262 = vpop.f32.mrb[0].mxu0
    %v1263 = vadd.f32 0.0, %v1262
    %v1264 = vpop.f32.mrb[0].mxu0
    %v1265 = vpop.f32.mrb[0].mxu0
    %v1266 = vadd.f32 0.0, %v1265
    %v1267 = vpop.f32.mrb[0].mxu0
    %1268 = vmatprep.mubr.bf16.mxu0 0
    %1269 = vmatmul.mubr.bf16.gmra.mrb[0].mxu0 %v1220
    %v1270 = vpop.f32.mrb[0].mxu0
    %v1271 = vadd.f32 0.0, %v1270
    %v1272 = vpop.f32.mrb[0].mxu0
    %v1273 = vpop.f32.mrb[0].mxu0
    %v1274 = vadd.f32 0.0, %v1273
    %v1275 = vpop.f32.mrb[0].mxu0
    %1276 = vmatprep.mubr.bf16.mxu0 0
    %1277 = vmatmul.mubr.bf16.gmra.mrb[0].mxu0 %v1223
    %v1278 = vpop.f32.mrb[0].mxu0
    %v1279 = vadd.f32 0.0, %v1278
    %v1280 = vpop.f32.mrb[0].mxu0
    %v1281 = vpop.f32.mrb[0].mxu0
    %v1282 = vadd.f32 0.0, %v1281
    %v1283 = vpop.f32.mrb[0].mxu0
    %1284 = vmatprep.mubr.bf16.mxu0 0
    %1285 = vmatmul.mubr.bf16.gmra.mrb[0].mxu0 %v1226
    %v1286 = vpop.f32.mrb[0].mxu0
    %v1287 = vadd.f32 0.0, %v1286
    %v1288 = vpop.f32.mrb[0].mxu0
    %v1289 = vpop.f32.mrb[0].mxu0
    %v1290 = vadd.f32 0.0, %v1289
    %v1291 = vpop.f32.mrb[0].mxu0
    %1292 = vdwg.mxu0
    %v1293 = vadd.f32 %v1044, %v1263
    %v1294 = vadd.f32 %v1045, %v1266
    %v1295 = vadd.f32 %v1046, %v1271
    %v1296 = vadd.f32 %v1047, %v1274
    %v1297 = vadd.f32 %v1048, %v1279
    %v1298 = vadd.f32 %v1049, %v1282
    %v1299 = vadd.f32 %v1050, %v1287
    %v1300 = vadd.f32 %v1051, %v1290
    %s1301 = scalar_lea.vmem %s3, 160
    %v1302 = vld [vmem:[%s1301] sm:$0xff]
    %v1303 = vld [vmem:[%s1301 + $0x8] sm:$0xff]
    %v1304 = vld [vmem:[%s1301 + $0x10] sm:$0xff]
    %v1305 = vld [vmem:[%s1301 + $0x18] sm:$0xff]
    %v1306 = vpack.c.bf16 %v1303, %v1302
    %v1307 = vpack.c.bf16 %v1305, %v1304
    %1308 = vmatprep.subr.bf16.mxu0 0
    %1309 = vmatpush1.bf16.msra.mxu0 %v1306
    %1310 = vmatprep.subr.bf16.mxu0 0
    %1311 = vmatpush1.bf16.msra.mxu0 %v1307
    %1312 = vmatprep.subr.bf16.mxu0 0
    %1313 = vmatpush1.bf16.msra.mxu0 0
    %1314 = vmatprep.subr.bf16.mxu0 0
    %1315 = vmatpush1.bf16.msra.mxu0 0
    %1316 = vmatprep.subr.bf16.mxu0 0
    %1317 = vmatpush1.bf16.msra.mxu0 0
    %1318 = vmatprep.subr.bf16.mxu0 0
    %1319 = vmatpush1.bf16.msra.mxu0 0
    %1320 = vmatprep.subr.bf16.mxu0 0
    %1321 = vmatpush1.bf16.msra.mxu0 0
    %1322 = vmatprep.subr.bf16.mxu0 0
    %1323 = vmatpush1.bf16.msra.mxu0 0
    %1324 = vmatprep.subr.bf16.mxu0 0
    %1325 = vmatpush1.bf16.msra.mxu0 0
    %1326 = vmatprep.subr.bf16.mxu0 0
    %1327 = vmatpush1.bf16.msra.mxu0 0
    %1328 = vmatprep.subr.bf16.mxu0 0
    %1329 = vmatpush1.bf16.msra.mxu0 0
    %1330 = vmatprep.subr.bf16.mxu0 0
    %1331 = vmatpush1.bf16.msra.mxu0 0
    %1332 = vmatprep.subr.bf16.mxu0 0
    %1333 = vmatpush1.bf16.msra.mxu0 0
    %1334 = vmatprep.subr.bf16.mxu0 0
    %1335 = vmatpush1.bf16.msra.mxu0 0
    %1336 = vmatprep.subr.bf16.mxu0 0
    %1337 = vmatpush1.bf16.msra.mxu0 0
    %1338 = vmatprep.subr.bf16.mxu0 0
    %1339 = vmatpush1.bf16.msra.mxu0 0
    %1340 = vmatprep.mubr.bf16.mxu0 0
    %1341 = vmatmul.mubr.bf16.gmra.mrb[0].mxu0 %v1217
    %v1342 = vpop.f32.mrb[0].mxu0
    %v1343 = vadd.f32 0.0, %v1342
    %v1344 = vpop.f32.mrb[0].mxu0
    %v1345 = vpop.f32.mrb[0].mxu0
    %v1346 = vadd.f32 0.0, %v1345
    %v1347 = vpop.f32.mrb[0].mxu0
    %1348 = vmatprep.mubr.bf16.mxu0 0
    %1349 = vmatmul.mubr.bf16.gmra.mrb[0].mxu0 %v1220
    %v1350 = vpop.f32.mrb[0].mxu0
    %v1351 = vadd.f32 0.0, %v1350
    %v1352 = vpop.f32.mrb[0].mxu0
    %v1353 = vpop.f32.mrb[0].mxu0
    %v1354 = vadd.f32 0.0, %v1353
    %v1355 = vpop.f32.mrb[0].mxu0
    %1356 = vmatprep.mubr.bf16.mxu0 0
    %1357 = vmatmul.mubr.bf16.gmra.mrb[0].mxu0 %v1223
    %v1358 = vpop.f32.mrb[0].mxu0
    %v1359 = vadd.f32 0.0, %v1358
    %v1360 = vpop.f32.mrb[0].mxu0
    %v1361 = vpop.f32.mrb[0].mxu0
    %v1362 = vadd.f32 0.0, %v1361
    %v1363 = vpop.f32.mrb[0].mxu0
    %1364 = vmatprep.mubr.bf16.mxu0 0
    %1365 = vmatmul.mubr.bf16.gmra.mrb[0].mxu0 %v1226
    %v1366 = vpop.f32.mrb[0].mxu0
    %v1367 = vadd.f32 0.0, %v1366
    %v1368 = vpop.f32.mrb[0].mxu0
    %v1369 = vpop.f32.mrb[0].mxu0
    %v1370 = vadd.f32 0.0, %v1369
    %v1371 = vpop.f32.mrb[0].mxu0
    %1372 = vdwg.mxu0
    %v1373 = vpack.c.bf16 %v1346, %v1343
    %v1374 = vpack.c.bf16 %v1354, %v1351
    %v1375 = vpack.c.bf16 %v1362, %v1359
    %v1376 = vpack.c.bf16 %v1370, %v1367
    %v1377 = vld [vmem:[%s4 + $0x5] sm:$0x1]
    %v1378 = vlaneseq
    %v1379 = vshrl.u32 %v1378, 7
    %v1380 = vsub.s32 0, %v1379
    %v1381 = vrot.slane %v1377, %v1380
    %1382 = vmatprep.subr.bf16.mxu0 0
    %1383 = vmatpush1.bf16.msra.mxu0 %v1373
    %1384 = vmatprep.subr.bf16.mxu0 0
    %1385 = vmatpush1.bf16.msra.mxu0 %v1374
    %1386 = vmatprep.subr.bf16.mxu0 0
    %1387 = vmatpush1.bf16.msra.mxu0 %v1375
    %1388 = vmatprep.subr.bf16.mxu0 0
    %1389 = vmatpush1.bf16.msra.mxu0 %v1376
    %1390 = vmatprep.subr.bf16.mxu0 0
    %1391 = vmatpush1.bf16.msra.mxu0 0
    %1392 = vmatprep.subr.bf16.mxu0 0
    %1393 = vmatpush1.bf16.msra.mxu0 0
    %1394 = vmatprep.subr.bf16.mxu0 0
    %1395 = vmatpush1.bf16.msra.mxu0 0
    %1396 = vmatprep.subr.bf16.mxu0 0
    %1397 = vmatpush1.bf16.msra.mxu0 0
    %1398 = vmatprep.subr.bf16.mxu0 0
    %1399 = vmatpush1.bf16.msra.mxu0 0
    %1400 = vmatprep.subr.bf16.mxu0 0
    %1401 = vmatpush1.bf16.msra.mxu0 0
    %1402 = vmatprep.subr.bf16.mxu0 0
    %1403 = vmatpush1.bf16.msra.mxu0 0
    %1404 = vmatprep.subr.bf16.mxu0 0
    %1405 = vmatpush1.bf16.msra.mxu0 0
    %1406 = vmatprep.subr.bf16.mxu0 0
    %1407 = vmatpush1.bf16.msra.mxu0 0
    %1408 = vmatprep.subr.bf16.mxu0 0
    %1409 = vmatpush1.bf16.msra.mxu0 0
    %1410 = vmatprep.subr.bf16.mxu0 0
    %1411 = vmatpush1.bf16.msra.mxu0 0
    %1412 = vmatprep.subr.bf16.mxu0 0
    %1413 = vmatpush1.bf16.msra.mxu0 0
    %1414 = vmatprep.mubr.bf16.mxu0 0
    %1415 = vmatmul.mubr.bf16.gmra.mrb[0].mxu0 %v51
    %v1416 = vpop.f32.mrb[0].mxu0
    %v1417 = vadd.f32 %v1381, %v1416
    %v1418 = vpop.f32.mrb[0].mxu0
    %v1419 = vpop.f32.mrb[0].mxu0
    %v1420 = vadd.f32 %v1381, %v1419
    %v1421 = vpop.f32.mrb[0].mxu0
    %1422 = vmatprep.mubr.bf16.mxu0 0
    %1423 = vmatmul.mubr.bf16.gmra.mrb[0].mxu0 %v54
    %v1424 = vpop.f32.mrb[0].mxu0
    %v1425 = vadd.f32 %v1381, %v1424
    %v1426 = vpop.f32.mrb[0].mxu0
    %v1427 = vpop.f32.mrb[0].mxu0
    %v1428 = vadd.f32 %v1381, %v1427
    %v1429 = vpop.f32.mrb[0].mxu0
    %1430 = vmatprep.mubr.bf16.mxu0 0
    %1431 = vmatmul.mubr.bf16.gmra.mrb[0].mxu0 %v57
    %v1432 = vpop.f32.mrb[0].mxu0
    %v1433 = vadd.f32 %v1381, %v1432
    %v1434 = vpop.f32.mrb[0].mxu0
    %v1435 = vpop.f32.mrb[0].mxu0
    %v1436 = vadd.f32 %v1381, %v1435
    %v1437 = vpop.f32.mrb[0].mxu0
    %1438 = vmatprep.mubr.bf16.mxu0 0
    %1439 = vmatmul.mubr.bf16.gmra.mrb[0].mxu0 %v60
    %v1440 = vpop.f32.mrb[0].mxu0
    %v1441 = vadd.f32 %v1381, %v1440
    %v1442 = vpop.f32.mrb[0].mxu0
    %v1443 = vpop.f32.mrb[0].mxu0
    %v1444 = vadd.f32 %v1381, %v1443
    %v1445 = vpop.f32.mrb[0].mxu0
    %1446 = vdwg.mxu0
    %v1447 = vmax.f32 %v1417, 0.0
    %v1448 = vmax.f32 %v1420, 0.0
    %v1449 = vmax.f32 %v1425, 0.0
    %v1450 = vmax.f32 %v1428, 0.0
    %v1451 = vmax.f32 %v1433, 0.0
    %v1452 = vmax.f32 %v1436, 0.0
    %v1453 = vmax.f32 %v1441, 0.0
    %v1454 = vmax.f32 %v1444, 0.0
    %v1455 = vpack.c.bf16 %v1448, %v1447
    %v1456 = vpack.c.bf16 %v1450, %v1449
    %v1457 = vpack.c.bf16 %v1452, %v1451
    %v1458 = vpack.c.bf16 %v1454, %v1453
    %v1459 = vld [vmem:[%s5 + $0xa0] sm:$0xff]
    %v1460 = vld [vmem:[%s5 + $0xa8] sm:$0xff]
    %v1461 = vld [vmem:[%s5 + $0xb0] sm:$0xff]
    %v1462 = vld [vmem:[%s5 + $0xb8] sm:$0xff]
    %v1463 = vpack.c.bf16 %v1460, %v1459
    %v1464 = vpack.c.bf16 %v1462, %v1461
    %v1466 = vsel %vm242, %v1455, 0
    %v1469 = vsel %vm242, %v1456, 0
    %v1472 = vsel %vm242, %v1457, 0
    %v1475 = vsel %vm242, %v1458, 0
    %1477 = vmatprep.subr.bf16.mxu0 0
    %1478 = vmatpush1.bf16.msra.mxu0 %v1463
    %1479 = vmatprep.subr.bf16.mxu0 0
    %1480 = vmatpush1.bf16.msra.mxu0 %v1464
    %1481 = vmatprep.subr.bf16.mxu0 0
    %1482 = vmatpush1.bf16.msra.mxu0 0
    %1483 = vmatprep.subr.bf16.mxu0 0
    %1484 = vmatpush1.bf16.msra.mxu0 0
    %1485 = vmatprep.subr.bf16.mxu0 0
    %1486 = vmatpush1.bf16.msra.mxu0 0
    %1487 = vmatprep.subr.bf16.mxu0 0
    %1488 = vmatpush1.bf16.msra.mxu0 0
    %1489 = vmatprep.subr.bf16.mxu0 0
    %1490 = vmatpush1.bf16.msra.mxu0 0
    %1491 = vmatprep.subr.bf16.mxu0 0
    %1492 = vmatpush1.bf16.msra.mxu0 0
    %1493 = vmatprep.subr.bf16.mxu0 0
    %1494 = vmatpush1.bf16.msra.mxu0 0
    %1495 = vmatprep.subr.bf16.mxu0 0
    %1496 = vmatpush1.bf16.msra.mxu0 0
    %1497 = vmatprep.subr.bf16.mxu0 0
    %1498 = vmatpush1.bf16.msra.mxu0 0
    %1499 = vmatprep.subr.bf16.mxu0 0
    %1500 = vmatpush1.bf16.msra.mxu0 0
    %1501 = vmatprep.subr.bf16.mxu0 0
    %1502 = vmatpush1.bf16.msra.mxu0 0
    %1503 = vmatprep.subr.bf16.mxu0 0
    %1504 = vmatpush1.bf16.msra.mxu0 0
    %1505 = vmatprep.subr.bf16.mxu0 0
    %1506 = vmatpush1.bf16.msra.mxu0 0
    %1507 = vmatprep.subr.bf16.mxu0 0
    %1508 = vmatpush1.bf16.msra.mxu0 0
    %1509 = vmatprep.mubr.bf16.mxu0 0
    %1510 = vmatmul.mubr.bf16.gmra.mrb[0].mxu0 %v1466
    %v1511 = vpop.f32.mrb[0].mxu0
    %v1512 = vadd.f32 0.0, %v1511
    %v1513 = vpop.f32.mrb[0].mxu0
    %v1514 = vpop.f32.mrb[0].mxu0
    %v1515 = vadd.f32 0.0, %v1514
    %v1516 = vpop.f32.mrb[0].mxu0
    %1517 = vmatprep.mubr.bf16.mxu0 0
    %1518 = vmatmul.mubr.bf16.gmra.mrb[0].mxu0 %v1469
    %v1519 = vpop.f32.mrb[0].mxu0
    %v1520 = vadd.f32 0.0, %v1519
    %v1521 = vpop.f32.mrb[0].mxu0
    %v1522 = vpop.f32.mrb[0].mxu0
    %v1523 = vadd.f32 0.0, %v1522
    %v1524 = vpop.f32.mrb[0].mxu0
    %1525 = vmatprep.mubr.bf16.mxu0 0
    %1526 = vmatmul.mubr.bf16.gmra.mrb[0].mxu0 %v1472
    %v1527 = vpop.f32.mrb[0].mxu0
    %v1528 = vadd.f32 0.0, %v1527
    %v1529 = vpop.f32.mrb[0].mxu0
    %v1530 = vpop.f32.mrb[0].mxu0
    %v1531 = vadd.f32 0.0, %v1530
    %v1532 = vpop.f32.mrb[0].mxu0
    %1533 = vmatprep.mubr.bf16.mxu0 0
    %1534 = vmatmul.mubr.bf16.gmra.mrb[0].mxu0 %v1475
    %v1535 = vpop.f32.mrb[0].mxu0
    %v1536 = vadd.f32 0.0, %v1535
    %v1537 = vpop.f32.mrb[0].mxu0
    %v1538 = vpop.f32.mrb[0].mxu0
    %v1539 = vadd.f32 0.0, %v1538
    %v1540 = vpop.f32.mrb[0].mxu0
    %1541 = vdwg.mxu0
    %v1542 = vadd.f32 %v1293, %v1512
    %v1543 = vadd.f32 %v1294, %v1515
    %v1544 = vadd.f32 %v1295, %v1520
    %v1545 = vadd.f32 %v1296, %v1523
    %v1546 = vadd.f32 %v1297, %v1528
    %v1547 = vadd.f32 %v1298, %v1531
    %v1548 = vadd.f32 %v1299, %v1536
    %v1549 = vadd.f32 %v1300, %v1539
    %v1550 = vld [vmem:[%s4 + $0x6] sm:$0x1]
    %v1551 = vlaneseq
    %v1552 = vshrl.u32 %v1551, 7
    %v1553 = vsub.s32 0, %v1552
    %v1554 = vrot.slane %v1550, %v1553
    %v1555 = vadd.f32 %v1542, %v1554
    %v1556 = vadd.f32 %v1543, %v1554
    %v1557 = vadd.f32 %v1544, %v1554
    %v1558 = vadd.f32 %v1545, %v1554
    %v1559 = vadd.f32 %v1546, %v1554
    %v1560 = vadd.f32 %v1547, %v1554
    %v1561 = vadd.f32 %v1548, %v1554
    %v1562 = vadd.f32 %v1549, %v1554
    %v1563 = vmax.f32 %v1555, 0.0
    %v1564 = vmax.f32 %v1556, 0.0
    %v1565 = vmax.f32 %v1557, 0.0
    %v1566 = vmax.f32 %v1558, 0.0
    %v1567 = vmax.f32 %v1559, 0.0
    %v1568 = vmax.f32 %v1560, 0.0
    %v1569 = vmax.f32 %v1561, 0.0
    %v1570 = vmax.f32 %v1562, 0.0
    %v1571 = vld [vmem:[%s2] sm:$0xf]
    %v1572 = vpack.c.bf16 %v1571, %v1571
    %v1573 = vpack.c.bf16 %v1564, %v1563
    %v1574 = vpack.c.bf16 %v1566, %v1565
    %v1575 = vpack.c.bf16 %v1568, %v1567
    %v1576 = vpack.c.bf16 %v1570, %v1569
    %v1578 = vsel %vm49, %v1572, 0
    %1580 = vmatprep.subr.bf16.mxu0 0
    %1581 = vmatpush1.bf16.msra.mxu0 %v1573
    %1582 = vmatprep.subr.bf16.mxu0 0
    %1583 = vmatpush1.bf16.msra.mxu0 %v1574
    %1584 = vmatprep.subr.bf16.mxu0 0
    %1585 = vmatpush1.bf16.msra.mxu0 %v1575
    %1586 = vmatprep.subr.bf16.mxu0 0
    %1587 = vmatpush1.bf16.msra.mxu0 %v1576
    %1588 = vmatprep.subr.bf16.mxu0 0
    %1589 = vmatpush1.bf16.msra.mxu0 0
    %1590 = vmatprep.subr.bf16.mxu0 0
    %1591 = vmatpush1.bf16.msra.mxu0 0
    %1592 = vmatprep.subr.bf16.mxu0 0
    %1593 = vmatpush1.bf16.msra.mxu0 0
    %1594 = vmatprep.subr.bf16.mxu0 0
    %1595 = vmatpush1.bf16.msra.mxu0 0
    %1596 = vmatprep.subr.bf16.mxu0 0
    %1597 = vmatpush1.bf16.msra.mxu0 0
    %1598 = vmatprep.subr.bf16.mxu0 0
    %1599 = vmatpush1.bf16.msra.mxu0 0
    %1600 = vmatprep.subr.bf16.mxu0 0
    %1601 = vmatpush1.bf16.msra.mxu0 0
    %1602 = vmatprep.subr.bf16.mxu0 0
    %1603 = vmatpush1.bf16.msra.mxu0 0
    %1604 = vmatprep.subr.bf16.mxu0 0
    %1605 = vmatpush1.bf16.msra.mxu0 0
    %1606 = vmatprep.subr.bf16.mxu0 0
    %1607 = vmatpush1.bf16.msra.mxu0 0
    %1608 = vmatprep.subr.bf16.mxu0 0
    %1609 = vmatpush1.bf16.msra.mxu0 0
    %1610 = vmatprep.subr.bf16.mxu0 0
    %1611 = vmatpush1.bf16.msra.mxu0 0
    %1612 = vmatprep.mubr.bf16.mxu0 0
    %1613 = vmatmul.mubr.bf16.gmra.mrb[0].mxu0 %v1578
    %v1614 = vpop.f32.mrb[0].mxu0
    %v1615 = vadd.f32 0.0, %v1614
    %v1616 = vpop.f32.mrb[0].mxu0
    %v1617 = vpop.f32.mrb[0].mxu0
    %v1618 = vpop.f32.mrb[0].mxu0
    %1619 = vdwg.mxu0
    %v1620 = vld [vmem:[%s5 + $0xc0] sm:$0xff]
    %v1621 = vld [vmem:[%s5 + $0xc8] sm:$0xff]
    %v1622 = vld [vmem:[%s5 + $0xd0] sm:$0xff]
    %v1623 = vld [vmem:[%s5 + $0xd8] sm:$0xff]
    %v1624 = vpack.c.bf16 %v1621, %v1620
    %v1625 = vpack.c.bf16 %v1623, %v1622
    %v1626 = vpack.c.bf16 %v1615, %v1615
    %v1627 = vld [vmem:[%s4 + $0x7] sm:$0x1]
    %v1628 = vlaneseq
    %v1629 = vshrl.u32 %v1628, 7
    %v1630 = vsub.s32 0, %v1629
    %v1631 = vrot.slane %v1627, %v1630
    %v1633 = vsel %vm242, %v1626, 0
    %1635 = vmatprep.subr.bf16.mxu0 0
    %1636 = vmatpush1.bf16.msra.mxu0 %v1624
    %1637 = vmatprep.subr.bf16.mxu0 0
    %1638 = vmatpush1.bf16.msra.mxu0 %v1625
    %1639 = vmatprep.subr.bf16.mxu0 0
    %1640 = vmatpush1.bf16.msra.mxu0 0
    %1641 = vmatprep.subr.bf16.mxu0 0
    %1642 = vmatpush1.bf16.msra.mxu0 0
    %1643 = vmatprep.subr.bf16.mxu0 0
    %1644 = vmatpush1.bf16.msra.mxu0 0
    %1645 = vmatprep.subr.bf16.mxu0 0
    %1646 = vmatpush1.bf16.msra.mxu0 0
    %1647 = vmatprep.subr.bf16.mxu0 0
    %1648 = vmatpush1.bf16.msra.mxu0 0
    %1649 = vmatprep.subr.bf16.mxu0 0
    %1650 = vmatpush1.bf16.msra.mxu0 0
    %1651 = vmatprep.subr.bf16.mxu0 0
    %1652 = vmatpush1.bf16.msra.mxu0 0
    %1653 = vmatprep.subr.bf16.mxu0 0
    %1654 = vmatpush1.bf16.msra.mxu0 0
    %1655 = vmatprep.subr.bf16.mxu0 0
    %1656 = vmatpush1.bf16.msra.mxu0 0
    %1657 = vmatprep.subr.bf16.mxu0 0
    %1658 = vmatpush1.bf16.msra.mxu0 0
    %1659 = vmatprep.subr.bf16.mxu0 0
    %1660 = vmatpush1.bf16.msra.mxu0 0
    %1661 = vmatprep.subr.bf16.mxu0 0
    %1662 = vmatpush1.bf16.msra.mxu0 0
    %1663 = vmatprep.subr.bf16.mxu0 0
    %1664 = vmatpush1.bf16.msra.mxu0 0
    %1665 = vmatprep.subr.bf16.mxu0 0
    %1666 = vmatpush1.bf16.msra.mxu0 0
    %1667 = vmatprep.mubr.bf16.mxu0 0
    %1668 = vmatmul.mubr.bf16.gmra.mrb[0].mxu0 %v1633
    %v1669 = vpop.f32.mrb[0].mxu0
    %v1670 = vadd.f32 %v1631, %v1669
    %v1671 = vpop.f32.mrb[0].mxu0
    %v1672 = vpop.f32.mrb[0].mxu0
    %v1673 = vpop.f32.mrb[0].mxu0
    %1674 = vdwg.mxu0
    %v1675 = vmax.f32 %v1670, 0.0
    %v1676 = vld [vmem:[%s5 + $0xe0] sm:$0xff]
    %v1677 = vld [vmem:[%s5 + $0xe8] sm:$0xff]
    %v1678 = vld [vmem:[%s5 + $0xf0] sm:$0xff]
    %v1679 = vld [vmem:[%s5 + $0xf8] sm:$0xff]
    %v1680 = vpack.c.bf16 %v1677, %v1676
    %v1681 = vpack.c.bf16 %v1679, %v1678
    %v1682 = vpack.c.bf16 %v1675, %v1675
    %v1683 = vld [vmem:[%s4 + $0x8] sm:$0x1]
    %v1684 = vlaneseq
    %v1685 = vshrl.u32 %v1684, 7
    %v1686 = vsub.s32 0, %v1685
    %v1687 = vrot.slane %v1683, %v1686
    %v1689 = vsel %vm242, %v1682, 0
    %1691 = vmatprep.subr.bf16.mxu0 0
    %1692 = vmatpush1.bf16.msra.mxu0 %v1680
    %1693 = vmatprep.subr.bf16.mxu0 0
    %1694 = vmatpush1.bf16.msra.mxu0 %v1681
    %1695 = vmatprep.subr.bf16.mxu0 0
    %1696 = vmatpush1.bf16.msra.mxu0 0
    %1697 = vmatprep.subr.bf16.mxu0 0
    %1698 = vmatpush1.bf16.msra.mxu0 0
    %1699 = vmatprep.subr.bf16.mxu0 0
    %1700 = vmatpush1.bf16.msra.mxu0 0
    %1701 = vmatprep.subr.bf16.mxu0 0
    %1702 = vmatpush1.bf16.msra.mxu0 0
    %1703 = vmatprep.subr.bf16.mxu0 0
    %1704 = vmatpush1.bf16.msra.mxu0 0
    %1705 = vmatprep.subr.bf16.mxu0 0
    %1706 = vmatpush1.bf16.msra.mxu0 0
    %1707 = vmatprep.subr.bf16.mxu0 0
    %1708 = vmatpush1.bf16.msra.mxu0 0
    %1709 = vmatprep.subr.bf16.mxu0 0
    %1710 = vmatpush1.bf16.msra.mxu0 0
    %1711 = vmatprep.subr.bf16.mxu0 0
    %1712 = vmatpush1.bf16.msra.mxu0 0
    %1713 = vmatprep.subr.bf16.mxu0 0
    %1714 = vmatpush1.bf16.msra.mxu0 0
    %1715 = vmatprep.subr.bf16.mxu0 0
    %1716 = vmatpush1.bf16.msra.mxu0 0
    %1717 = vmatprep.subr.bf16.mxu0 0
    %1718 = vmatpush1.bf16.msra.mxu0 0
    %1719 = vmatprep.subr.bf16.mxu0 0
    %1720 = vmatpush1.bf16.msra.mxu0 0
    %1721 = vmatprep.subr.bf16.mxu0 0
    %1722 = vmatpush1.bf16.msra.mxu0 0
    %1723 = vmatprep.mubr.bf16.mxu0 0
    %1724 = vmatmul.mubr.bf16.gmra.mrb[0].mxu0 %v1689
    %v1725 = vpop.f32.mrb[0].mxu0
    %v1726 = vadd.f32 %v1687, %v1725
    %v1727 = vpop.f32.mrb[0].mxu0
    %v1728 = vpop.f32.mrb[0].mxu0
    %v1729 = vpop.f32.mrb[0].mxu0
    %1730 = vdwg.mxu0
    %vm1731 = vcmask 60416
    %v1732 = vsel %vm1731, %v1726, -inf
    %1733 = vmax.xlane.f32.xlu0 %v1732
    %v1734 = vpop.xlane.xlu0 %1733
    %v1735 = vsub.f32 %v1726, %v1734
    %v1736 = vmul.f32 %v1735, 1.442695
    %v1737 = vpow.pop %v1736
    %v1738 = vsel %vm1731, %v1737, 0.0
    %1739 = vadd.xlane.f32.xlu0 %v1738
    %v1740 = vpop.xlane.xlu0 %1739
    %v1741 = vrcp.pop %v1740
    %v1742 = vmul.f32 %v1737, %v1741
    %1743 = vst.msk [vmem:[#allocation2] sm:$0xf] %vm1731, %v1742
    // Predicated region
    $region26: #{tpu_custom_call.1} parent=1 // pred_check
      _
    $region27: #{tpu_custom_call.1} parent=1 // pred_check_branch
      %1745 = sbr.rel (0) target = $region29
    $region28: #{tpu_custom_call.1} parent=1 // pred_region
      %s1747 = ssub.s32 64, 64
      %1748 = vsyncadd [#allocation3], %s1747
      %s1750 = sshll.u32 [#allocation2], 4
      %s1751 = int_to_ptr.vmem [resolvable:$true] %s1750
      %1753 = dma.vmem_to_hbm [thread:$0]  %s1751, 64, %s6, [#allocation3]
    $region29: #{tpu_custom_call.1} parent=1 // pred_fallthru
      _
    // Predicated region
    $region30: #{tpu_custom_call.1} parent=1 // pred_check
      _
    $region31: #{tpu_custom_call.1} parent=1 // pred_check_branch
      %1755 = sbr.rel (0) target = $region33
    $region32: #{tpu_custom_call.1} parent=1 // pred_region
      %1756 = dma.done [#allocation3], 64
    $region33: #{tpu_custom_call.1} parent=1 // pred_fallthru
      _
    %1757 = vsyncpa [#allocation3], 1

</llo_original>
